<compile_context>
chip_gen: v7x
topology: tpu7x:2x2x1
jax: 0.10.0
libtpu: 0.0.40
codegen_flags: <defaults>
</compile_context>

<pallas_src>
import functools

import numpy as np
import jax
import jax.numpy as jnp
from jax import lax
from jax.experimental import pallas as pl
from jax.experimental.pallas import tpu as pltpu


# ----------------------------------------------------------------------------
# Rotary matrix (reproduces the *free function* get_rotary_matrix used by the
# model, including its bug: theta uses (i-1), the [2i,2i] entry ends up as
# -sin(m*theta), and the [2i,2i+1] entry is never set).
# ----------------------------------------------------------------------------
def get_rotary_matrix_np(context_window, d):
    R = np.zeros((context_window, d, d), np.float32)
    for position in range(context_window):
        for i in range(d // 2):
            theta = 10000.0 ** (-2.0 * (i - 1) / d)
            m_theta = position * theta
            R[position, 2 * i, 2 * i] = np.cos(theta)        # overwritten (bug preserved)
            R[position, 2 * i, 2 * i] = -np.sin(m_theta)
            R[position, 2 * i + 1, 2 * i] = np.sin(m_theta)
            R[position, 2 * i + 1, 2 * i + 1] = np.cos(m_theta)
    return R


def rotary_coeffs(context_window, d):
    # For the sparse R above:  (x @ R[p])[2i]   = -sin*x[2i] + sin*x[2i+1]
    #                          (x @ R[p])[2i+1] =  cos*x[2i+1]
    # i.e.  x @ R[p] == A[p]*x + (Bv[p]*x) @ P  with P[2i+1, 2i] = 1.
    A = np.zeros((context_window, d), np.float32)
    Bv = np.zeros((context_window, d), np.float32)
    for p in range(context_window):
        for i in range(d // 2):
            theta = 10000.0 ** (-2.0 * (i - 1) / d)
            m_theta = p * theta
            A[p, 2 * i] = -np.sin(m_theta)
            A[p, 2 * i + 1] = np.cos(m_theta)
            Bv[p, 2 * i + 1] = np.sin(m_theta)
    return jnp.asarray(A), jnp.asarray(Bv)


# ----------------------------------------------------------------------------
# Fused forward kernel: one grid step == one batch element.
# ----------------------------------------------------------------------------
def _fused_kernel(x_ref, scale_ref, wqkv_ref, a_ref, b_ref, p_ref,
                  wo_ref, bo_ref, w1_ref, b1_ref, wg_ref, bg_ref,
                  wl_ref, bl_ref, beta_ref, wlast_ref, blast_ref,
                  o_ref, *, n_heads):
    x = x_ref[0]                                    # (m, d)
    m_, d_ = x.shape
    inv_md = 1.0 / jnp.float32(m_ * d_)
    scale = scale_ref[...]                          # (m, d)

    def rmsnorm(t):
        msq = jnp.sum(t * t) * inv_md               # per-batch-element mean square
        return scale * t * lax.rsqrt(msq)

    x1 = rmsnorm(x)

    # Fused Q/K/V projection for all heads: (m, 3*H*d), lane-dense.
    qkv = jnp.dot(x1, wqkv_ref[...], preferred_element_type=jnp.float32)
    hd = n_heads * d_
    qk = qkv[:, : 2 * hd]                           # Q||K stack (m, 2*H*d)
    v_all = qkv[:, 2 * hd:]                         # (m, H*d)

    # RoPE (buggy-R semantics) applied to the whole Q||K stack in one matmul:
    #   rot(t)[2i] = -sin*t[2i] + sin*t[2i+1] ; rot(t)[2i+1] = cos*t[2i+1]
    qk_rot = a_ref[...] * qk + jnp.dot(b_ref[...] * qk, p_ref[...],
                                       preferred_element_type=jnp.float32)

    inv_sqrt_d = 1.0 / jnp.sqrt(jnp.float32(d_))
    row = lax.broadcasted_iota(jnp.int32, (m_, m_), 0)
    col = lax.broadcasted_iota(jnp.int32, (m_, m_), 1)
    causal = col <= row

    heads = []
    for h in range(n_heads):                        # static unroll (H is small)
        qr = qk_rot[:, h * d_:(h + 1) * d_]
        kr = qk_rot[:, hd + h * d_: hd + (h + 1) * d_]
        vh = v_all[:, h * d_:(h + 1) * d_]
        s = lax.dot_general(qr, kr, (((1,), (1,)), ((), ())),
                            preferred_element_type=jnp.float32) * inv_sqrt_d
        s = jnp.where(causal, s, jnp.float32(-1e30))
        s = s - jnp.max(s, axis=-1, keepdims=True)
        e = jnp.exp(s)
        p = e * pl.reciprocal(jnp.sum(e, axis=-1, keepdims=True), approx=True)
        # TODO(synk): SDPA dropout_p=0.1 is stochastic; omitted (eval semantics).
        heads.append(jnp.dot(p, vh, preferred_element_type=jnp.float32))
    cat = jnp.concatenate(heads, axis=-1)           # (m, H*d)  == torch.cat order

    # Output projection + residual (stays in VMEM).
    attn = jnp.dot(cat, wo_ref[...], preferred_element_type=jnp.float32) + bo_ref[...]
    # TODO(synk): nn.Dropout(0.1) after the projection omitted (eval semantics).
    x2 = x1 + attn

    # Second RMSNorm + Sequential(Linear, SwiGLU) + residual.
    xn = rmsnorm(x2)
    h1 = jnp.dot(xn, w1_ref[...], preferred_element_type=jnp.float32) + b1_ref[...]
    g = jnp.dot(h1, wg_ref[...], preferred_element_type=jnp.float32) + bg_ref[...]
    lin = jnp.dot(h1, wl_ref[...], preferred_element_type=jnp.float32) + bl_ref[...]
    beta = beta_ref[0]                              # scalar from SMEM
    swish = g * (1.0 / (1.0 + jnp.exp(-(beta * g))))
    x3 = xn + swish * lin

    # Vocab projection.
    logits = jnp.dot(x3, wlast_ref[...], preferred_element_type=jnp.float32) + blast_ref[...]
    o_ref[...] = logits[None].astype(o_ref.dtype)


# ----------------------------------------------------------------------------
# Parameter packing (done once, outside the forward pass).
# ----------------------------------------------------------------------------
def pack_params(params, cfg):
    d, H, C = cfg["d_model"], cfg["n_heads"], cfg["context_window"]
    A, Bv = rotary_coeffs(C, d)                     # (C, d) each

    # Stack per-head Q, then K, then V weights -> (d, 3*H*d)
    wq_cat = jnp.transpose(params["wq"], (1, 0, 2)).reshape(d, H * d)
    wk_cat = jnp.transpose(params["wk"], (1, 0, 2)).reshape(d, H * d)
    wv_cat = jnp.transpose(params["wv"], (1, 0, 2)).reshape(d, H * d)
    wqkv = jnp.concatenate([wq_cat, wk_cat, wv_cat], axis=1)

    n2 = 2 * H * d
    p_big = np.zeros((n2, n2), np.float32)
    p_big[np.arange(1, n2, 2), np.arange(0, n2, 2)] = 1.0   # shift odd -> even

    return {
        "embedding": params["embedding"],
        "rms_scale": params["rms_scale"],
        "wqkv": wqkv,
        "a_rot": jnp.tile(A, (1, 2 * H)),           # (C, 2*H*d)
        "b_rot": jnp.tile(Bv, (1, 2 * H)),
        "p_big": jnp.asarray(p_big),
        "wo": params["wo"], "bo2": params["bo"].reshape(1, d),
        "w1": params["w1"], "b12": params["b1"].reshape(1, d),
        "wg": params["wg"], "bg2": params["bg"].reshape(1, d),
        "wl": params["wl"], "bl2": params["bl"].reshape(1, d),
        "beta1": params["beta"].reshape(1),
        "w_last": params["w_last"],
        "blast2": params["b_last"].reshape(1, cfg["vocab_size"]),
    }


# ----------------------------------------------------------------------------
# Forward: one embedding gather (XLA glue) + ONE fused pallas_call.
# ----------------------------------------------------------------------------
def rope_model_forward(idx, packed, cfg):
    B, m = idx.shape
    d, H, V = cfg["d_model"], cfg["n_heads"], cfg["vocab_size"]
    hd2 = 2 * H * d

    # TODO(synk): embedding gather kept as a plain XLA gather (dynamic token
    # indices); could be fused via scalar prefetch but gains are negligible here.
    x = packed["embedding"][idx]                    # (B, m, d)
    scale = packed["rms_scale"][:m]
    a_qk = packed["a_rot"][:m]
    b_qk = packed["b_rot"][:m]

    kernel = functools.partial(_fused_kernel, n_heads=H)

    return pl.pallas_call(
        kernel,
        out_shape=jax.ShapeDtypeStruct((B, m, V), jnp.float32),
        grid=(B,),
        in_specs=[
            pl.BlockSpec((1, m, d), lambda b: (b, 0, 0)),        # x
            pl.BlockSpec((m, d), lambda b: (0, 0)),              # rms scale
            pl.BlockSpec((d, 3 * H * d), lambda b: (0, 0)),      # fused QKV weight
            pl.BlockSpec((m, hd2), lambda b: (0, 0)),            # rotary A (tiled)
            pl.BlockSpec((m, hd2), lambda b: (0, 0)),            # rotary Bv (tiled)
            pl.BlockSpec((hd2, hd2), lambda b: (0, 0)),          # shift matrix
            pl.BlockSpec((H * d, d), lambda b: (0, 0)),          # wo
            pl.BlockSpec((1, d), lambda b: (0, 0)),              # bo
            pl.BlockSpec((d, d), lambda b: (0, 0)),              # w1
            pl.BlockSpec((1, d), lambda b: (0, 0)),              # b1
            pl.BlockSpec((d, d), lambda b: (0, 0)),              # wg
            pl.BlockSpec((1, d), lambda b: (0, 0)),              # bg
            pl.BlockSpec((d, d), lambda b: (0, 0)),              # wl
            pl.BlockSpec((1, d), lambda b: (0, 0)),              # bl
            pl.BlockSpec(memory_space=pltpu.MemorySpace.SMEM),   # beta (scalar)
            pl.BlockSpec((d, V), lambda b: (0, 0)),              # w_last
            pl.BlockSpec((1, V), lambda b: (0, 0)),              # b_last
        ],
        out_specs=pl.BlockSpec((1, m, V), lambda b: (b, 0, 0)),
        compiler_params=pltpu.CompilerParams(
            dimension_semantics=("parallel",)),                  # v7x: 2 TCs split batch
    )(x, scale, packed["wqkv"], a_qk, b_qk, packed["p_big"],
      packed["wo"], packed["bo2"], packed["w1"], packed["b12"],
      packed["wg"], packed["bg2"], packed["wl"], packed["bl2"],
      packed["beta1"], packed["w_last"], packed["blast2"])


# ----------------------------------------------------------------------------
# Pure-JAX reference (full R matrices + bmm, independent of the elementwise
# rotation trick used in the kernel) for a correctness check.
# ----------------------------------------------------------------------------
def reference_forward(idx, params, cfg):
    d, H, C = cfg["d_model"], cfg["n_heads"], cfg["context_window"]
    B, m = idx.shape
    R = jnp.asarray(get_rotary_matrix_np(C, d))[:m]
    x = params["embedding"][idx]
    scale = params["rms_scale"][:m]

    def rms(t):
        norm = jnp.sqrt(jnp.sum(t * t, axis=(1, 2), keepdims=True))
        ff_rms = norm * (m * d) ** (-0.5)
        return scale[None] * (t / ff_rms)

    x = rms(x)
    heads = []
    for h in range(H):
        q = x @ params["wq"][h]
        k = x @ params["wk"][h]
        v = x @ params["wv"][h]
        qr = jnp.einsum("bpd,pde->bpe", q, R)
        kr = jnp.einsum("bpd,pde->bpe", k, R)
        s = jnp.einsum("bqd,bkd->bqk", qr, kr) / np.sqrt(d)
        mask = np.tril(np.ones((m, m), dtype=bool))
        s = jnp.where(mask[None], s, -jnp.inf)
        p = jax.nn.softmax(s, axis=-1)
        heads.append(jnp.einsum("bqk,bkd->bqd", p, v))
    cat = jnp.concatenate(heads, axis=-1)
    x = x + (cat @ params["wo"] + params["bo"])
    x = rms(x)
    h1 = x @ params["w1"] + params["b1"]
    g = h1 @ params["wg"] + params["bg"]
    lin = h1 @ params["wl"] + params["bl"]
    x = x + g * jax.nn.sigmoid(params["beta"][0] * g) * lin
    return x @ params["w_last"] + params["b_last"]


# ----------------------------------------------------------------------------
if __name__ == "__main__":
    cfg = dict(vocab_size=64, d_model=32, context_window=16, n_heads=2)
    B, m = 2, 8
    d, V, H, C = cfg["d_model"], cfg["vocab_size"], cfg["n_heads"], cfg["context_window"]

    key = jax.random.PRNGKey(0)
    ks = jax.random.split(key, 16)

    def rnd(k, shape, s=0.05):
        return jax.random.normal(k, shape, jnp.float32) * s

    params = {
        "embedding": rnd(ks[0], (V, d), 1.0),
        "rms_scale": jnp.ones((C, d), jnp.float32),   # nn.Parameter(torch.ones(...))
        "wq": rnd(ks[1], (H, d, d)),
        "wk": rnd(ks[2], (H, d, d)),
        "wv": rnd(ks[3], (H, d, d)),
        "wo": rnd(ks[4], (H * d, d)), "bo": rnd(ks[5], (d,)),
        "w1": rnd(ks[6], (d, d)), "b1": rnd(ks[7], (d,)),
        "wg": rnd(ks[8], (d, d)), "bg": rnd(ks[9], (d,)),
        "wl": rnd(ks[10], (d, d)), "bl": rnd(ks[11], (d,)),
        "beta": jnp.ones((1,), jnp.float32),          # nn.Parameter(torch.ones(1))
        "w_last": rnd(ks[12], (d, V)), "b_last": rnd(ks[13], (V,)),
    }

    packed = pack_params(params, cfg)
    idx = jax.random.randint(ks[14], (B, m), 0, V)

    logits = rope_model_forward(idx, packed, cfg)
    logits = jax.block_until_ready(logits)

    ref = reference_forward(idx, params, cfg)
    np.testing.assert_allclose(np.asarray(logits), np.asarray(ref), rtol=3e-2, atol=3e-2)

    print("KERNEL_OK")
</pallas_src>

<mosaic_0001>
module attributes {stable_mosaic.version = 11 : i64} {
  func.func @_fused_kernel(%arg0: i32, %arg1: memref<1x8x32xf32, #tpu.memory_space<vmem>>, %arg2: memref<8x32xf32, #tpu.memory_space<vmem>>, %arg3: memref<32x192xf32, #tpu.memory_space<vmem>>, %arg4: memref<8x128xf32, #tpu.memory_space<vmem>>, %arg5: memref<8x128xf32, #tpu.memory_space<vmem>>, %arg6: memref<128x128xf32, #tpu.memory_space<vmem>>, %arg7: memref<64x32xf32, #tpu.memory_space<vmem>>, %arg8: memref<1x32xf32, #tpu.memory_space<vmem>>, %arg9: memref<32x32xf32, #tpu.memory_space<vmem>>, %arg10: memref<1x32xf32, #tpu.memory_space<vmem>>, %arg11: memref<32x32xf32, #tpu.memory_space<vmem>>, %arg12: memref<1x32xf32, #tpu.memory_space<vmem>>, %arg13: memref<32x32xf32, #tpu.memory_space<vmem>>, %arg14: memref<1x32xf32, #tpu.memory_space<vmem>>, %arg15: memref<1xf32, #tpu.memory_space<smem>>, %arg16: memref<32x64xf32, #tpu.memory_space<vmem>>, %arg17: memref<1x64xf32, #tpu.memory_space<vmem>>, %arg18: memref<1x8x64xf32, #tpu.memory_space<vmem>>) attributes {dimension_semantics = [#tpu.dimension_semantics<parallel>], iteration_bounds = array<i64: 2>, scalar_prefetch = 0 : i64, scratch_operands = 0 : i64, tpu.core_type = #tpu.core_type<tc>, window_params = [{transform_indices = @transform_0, window_bounds = array<i64: 1, 8, 32>}, {pipeline_mode = #tpu.pipeline_mode<synchronous>, transform_indices = @transform_1, window_bounds = array<i64: 8, 32>}, {pipeline_mode = #tpu.pipeline_mode<synchronous>, transform_indices = @transform_2, window_bounds = array<i64: 32, 192>}, {pipeline_mode = #tpu.pipeline_mode<synchronous>, transform_indices = @transform_3, window_bounds = array<i64: 8, 128>}, {pipeline_mode = #tpu.pipeline_mode<synchronous>, transform_indices = @transform_4, window_bounds = array<i64: 8, 128>}, {pipeline_mode = #tpu.pipeline_mode<synchronous>, transform_indices = @transform_5, window_bounds = array<i64: 128, 128>}, {pipeline_mode = #tpu.pipeline_mode<synchronous>, transform_indices = @transform_6, window_bounds = array<i64: 64, 32>}, {pipeline_mode = #tpu.pipeline_mode<synchronous>, transform_indices = @transform_7, window_bounds = array<i64: 1, 32>}, {pipeline_mode = #tpu.pipeline_mode<synchronous>, transform_indices = @transform_8, window_bounds = array<i64: 32, 32>}, {pipeline_mode = #tpu.pipeline_mode<synchronous>, transform_indices = @transform_9, window_bounds = array<i64: 1, 32>}, {pipeline_mode = #tpu.pipeline_mode<synchronous>, transform_indices = @transform_10, window_bounds = array<i64: 32, 32>}, {pipeline_mode = #tpu.pipeline_mode<synchronous>, transform_indices = @transform_11, window_bounds = array<i64: 1, 32>}, {pipeline_mode = #tpu.pipeline_mode<synchronous>, transform_indices = @transform_12, window_bounds = array<i64: 32, 32>}, {pipeline_mode = #tpu.pipeline_mode<synchronous>, transform_indices = @transform_13, window_bounds = array<i64: 1, 32>}, {transform_indices = @transform_14, window_bounds = array<i64: 1>}, {pipeline_mode = #tpu.pipeline_mode<synchronous>, transform_indices = @transform_15, window_bounds = array<i64: 32, 64>}, {pipeline_mode = #tpu.pipeline_mode<synchronous>, transform_indices = @transform_16, window_bounds = array<i64: 1, 64>}, {transform_indices = @transform_17, window_bounds = array<i64: 1, 8, 64>}]} {
    %c0 = arith.constant 0 : index
    %c0_0 = arith.constant 0 : index
    %c0_1 = arith.constant 0 : index
    %0 = vector.load %arg1[%c0, %c0_0, %c0_1] : memref<1x8x32xf32, #tpu.memory_space<vmem>>, vector<1x8x32xf32>
    %1 = vector.shape_cast %0 : vector<1x8x32xf32> to vector<8x32xf32>
    %cst = arith.constant 1.000000e+00 : f32
    %cst_2 = arith.constant 2.560000e+02 : f32
    %2 = arith.divf %cst, %cst_2 : f32
    %c0_3 = arith.constant 0 : index
    %c0_4 = arith.constant 0 : index
    %3 = vector.load %arg2[%c0_3, %c0_4] : memref<8x32xf32, #tpu.memory_space<vmem>>, vector<8x32xf32>
    %4 = arith.mulf %1, %1 : vector<8x32xf32>
    %5 = vector.shape_cast %4 : vector<8x32xf32> to vector<1x8x32xf32>
    %cst_5 = arith.constant dense<0.000000e+00> : vector<1xf32>
    %6 = vector.multi_reduction <add>, %5, %cst_5 [1, 2] : vector<1x8x32xf32> to vector<1xf32>
    %7 = vector.shape_cast %6 : vector<1xf32> to vector<1x1x1xf32>
    %8 = vector.extract %7[0, 0, 0] : f32 from vector<1x1x1xf32>
    %9 = arith.mulf %8, %2 : f32
    %10 = arith.mulf %3, %1 : vector<8x32xf32>
    %11 = math.rsqrt %9 : f32
    %12 = vector.broadcast %11 : f32 to vector<8x32xf32>
    %13 = arith.mulf %10, %12 : vector<8x32xf32>
    %c0_6 = arith.constant 0 : index
    %c0_7 = arith.constant 0 : index
    %14 = vector.load %arg3[%c0_6, %c0_7] : memref<32x192xf32, #tpu.memory_space<vmem>>, vector<32x192xf32>
    %cst_8 = arith.constant dense<0.000000e+00> : vector<8x192xf32>
    %15 = tpu.matmul %13, %14, %cst_8 {dimension_numbers = #tpu.dot_dimension_numbers<[1], [0], [0], [1], [0, 0, 1, 1], [], []>} : vector<8x32xf32>, vector<32x192xf32>, vector<8x192xf32> -> vector<8x192xf32>
    %16 = vector.extract_strided_slice %15 {offsets = [0, 0], sizes = [8, 128], strides = [1, 1]} : vector<8x192xf32> to vector<8x128xf32>
    %17 = vector.extract_strided_slice %15 {offsets = [0, 128], sizes = [8, 64], strides = [1, 1]} : vector<8x192xf32> to vector<8x64xf32>
    %c0_9 = arith.constant 0 : index
    %c0_10 = arith.constant 0 : index
    %18 = vector.load %arg4[%c0_9, %c0_10] : memref<8x128xf32, #tpu.memory_space<vmem>>, vector<8x128xf32>
    %19 = arith.mulf %18, %16 : vector<8x128xf32>
    %c0_11 = arith.constant 0 : index
    %c0_12 = arith.constant 0 : index
    %20 = vector.load %arg5[%c0_11, %c0_12] : memref<8x128xf32, #tpu.memory_space<vmem>>, vector<8x128xf32>
    %21 = arith.mulf %20, %16 : vector<8x128xf32>
    %c0_13 = arith.constant 0 : index
    %c0_14 = arith.constant 0 : index
    %22 = vector.load %arg6[%c0_13, %c0_14] : memref<128x128xf32, #tpu.memory_space<vmem>>, vector<128x128xf32>
    %cst_15 = arith.constant dense<0.000000e+00> : vector<8x128xf32>
    %23 = tpu.matmul %21, %22, %cst_15 {dimension_numbers = #tpu.dot_dimension_numbers<[1], [0], [0], [1], [0, 0, 1, 1], [], []>} : vector<8x128xf32>, vector<128x128xf32>, vector<8x128xf32> -> vector<8x128xf32>
    %24 = arith.addf %19, %23 : vector<8x128xf32>
    %cst_16 = arith.constant 3.200000e+01 : f32
    %25 = math.sqrt %cst_16 : f32
    %cst_17 = arith.constant 1.000000e+00 : f32
    %26 = arith.divf %cst_17, %25 : f32
    %27 = tpu.iota {dimensions = array<i32: 0>} : vector<8x8xi32>
    %28 = tpu.iota {dimensions = array<i32: 1>} : vector<8x8xi32>
    %29 = arith.cmpi sle, %28, %27 : vector<8x8xi32>
    %30 = vector.extract_strided_slice %24 {offsets = [0, 0], sizes = [8, 32], strides = [1, 1]} : vector<8x128xf32> to vector<8x32xf32>
    %31 = vector.extract_strided_slice %24 {offsets = [0, 64], sizes = [8, 32], strides = [1, 1]} : vector<8x128xf32> to vector<8x32xf32>
    %32 = vector.extract_strided_slice %17 {offsets = [0, 0], sizes = [8, 32], strides = [1, 1]} : vector<8x64xf32> to vector<8x32xf32>
    %cst_18 = arith.constant dense<0.000000e+00> : vector<8x8xf32>
    %33 = tpu.matmul %30, %31, %cst_18 {dimension_numbers = #tpu.dot_dimension_numbers<[1], [1], [0], [0], [0, 0, 1, 0], [], []>} : vector<8x32xf32>, vector<8x32xf32>, vector<8x8xf32> -> vector<8x8xf32>
    %34 = vector.broadcast %26 : f32 to vector<8x8xf32>
    %35 = arith.mulf %33, %34 : vector<8x8xf32>
    %cst_19 = arith.constant -1.000000e+30 : f32
    %36 = vector.broadcast %cst_19 : f32 to vector<8x8xf32>
    %37 = arith.select %29, %35, %36 : vector<8x8xi1>, vector<8x8xf32>
    %cst_20 = arith.constant dense<0xFF800000> : vector<8xf32>
    %38 = vector.multi_reduction <maximumf>, %37, %cst_20 [1] : vector<8x8xf32> to vector<8xf32>
    %39 = vector.shape_cast %38 : vector<8xf32> to vector<8x1xf32>
    %40 = vector.broadcast %39 : vector<8x1xf32> to vector<8x8xf32>
    %41 = arith.subf %37, %40 : vector<8x8xf32>
    %42 = math.exp %41 : vector<8x8xf32>
    %cst_21 = arith.constant dense<0.000000e+00> : vector<8xf32>
    %43 = vector.multi_reduction <add>, %42, %cst_21 [1] : vector<8x8xf32> to vector<8xf32>
    %44 = vector.shape_cast %43 : vector<8xf32> to vector<8x1xf32>
    %45 = tpu.reciprocal %44 {approx = true} : vector<8x1xf32> -> vector<8x1xf32>
    %46 = vector.broadcast %45 : vector<8x1xf32> to vector<8x8xf32>
    %47 = arith.mulf %42, %46 : vector<8x8xf32>
    %cst_22 = arith.constant dense<0.000000e+00> : vector<8x32xf32>
    %48 = tpu.matmul %47, %32, %cst_22 {dimension_numbers = #tpu.dot_dimension_numbers<[1], [0], [0], [1], [0, 0, 1, 1], [], []>} : vector<8x8xf32>, vector<8x32xf32>, vector<8x32xf32> -> vector<8x32xf32>
    %49 = vector.extract_strided_slice %24 {offsets = [0, 32], sizes = [8, 32], strides = [1, 1]} : vector<8x128xf32> to vector<8x32xf32>
    %50 = vector.extract_strided_slice %24 {offsets = [0, 96], sizes = [8, 32], strides = [1, 1]} : vector<8x128xf32> to vector<8x32xf32>
    %51 = vector.extract_strided_slice %17 {offsets = [0, 32], sizes = [8, 32], strides = [1, 1]} : vector<8x64xf32> to vector<8x32xf32>
    %cst_23 = arith.constant dense<0.000000e+00> : vector<8x8xf32>
    %52 = tpu.matmul %49, %50, %cst_23 {dimension_numbers = #tpu.dot_dimension_numbers<[1], [1], [0], [0], [0, 0, 1, 0], [], []>} : vector<8x32xf32>, vector<8x32xf32>, vector<8x8xf32> -> vector<8x8xf32>
    %53 = vector.broadcast %26 : f32 to vector<8x8xf32>
    %54 = arith.mulf %52, %53 : vector<8x8xf32>
    %cst_24 = arith.constant -1.000000e+30 : f32
    %55 = vector.broadcast %cst_24 : f32 to vector<8x8xf32>
    %56 = arith.select %29, %54, %55 : vector<8x8xi1>, vector<8x8xf32>
    %cst_25 = arith.constant dense<0xFF800000> : vector<8xf32>
    %57 = vector.multi_reduction <maximumf>, %56, %cst_25 [1] : vector<8x8xf32> to vector<8xf32>
    %58 = vector.shape_cast %57 : vector<8xf32> to vector<8x1xf32>
    %59 = vector.broadcast %58 : vector<8x1xf32> to vector<8x8xf32>
    %60 = arith.subf %56, %59 : vector<8x8xf32>
    %61 = math.exp %60 : vector<8x8xf32>
    %cst_26 = arith.constant dense<0.000000e+00> : vector<8xf32>
    %62 = vector.multi_reduction <add>, %61, %cst_26 [1] : vector<8x8xf32> to vector<8xf32>
    %63 = vector.shape_cast %62 : vector<8xf32> to vector<8x1xf32>
    %64 = tpu.reciprocal %63 {approx = true} : vector<8x1xf32> -> vector<8x1xf32>
    %65 = vector.broadcast %64 : vector<8x1xf32> to vector<8x8xf32>
    %66 = arith.mulf %61, %65 : vector<8x8xf32>
    %cst_27 = arith.constant dense<0.000000e+00> : vector<8x32xf32>
    %67 = tpu.matmul %66, %51, %cst_27 {dimension_numbers = #tpu.dot_dimension_numbers<[1], [0], [0], [1], [0, 0, 1, 1], [], []>} : vector<8x8xf32>, vector<8x32xf32>, vector<8x32xf32> -> vector<8x32xf32>
    %68 = tpu.concatenate %48, %67 in 1 : vector<8x32xf32>, vector<8x32xf32> -> vector<8x64xf32>
    %c0_28 = arith.constant 0 : index
    %c0_29 = arith.constant 0 : index
    %69 = vector.load %arg7[%c0_28, %c0_29] : memref<64x32xf32, #tpu.memory_space<vmem>>, vector<64x32xf32>
    %cst_30 = arith.constant dense<0.000000e+00> : vector<8x32xf32>
    %70 = tpu.matmul %68, %69, %cst_30 {dimension_numbers = #tpu.dot_dimension_numbers<[1], [0], [0], [1], [0, 0, 1, 1], [], []>} : vector<8x64xf32>, vector<64x32xf32>, vector<8x32xf32> -> vector<8x32xf32>
    %c0_31 = arith.constant 0 : index
    %c0_32 = arith.constant 0 : index
    %71 = vector.load %arg8[%c0_31, %c0_32] : memref<1x32xf32, #tpu.memory_space<vmem>>, vector<1x32xf32>
    %72 = vector.broadcast %71 : vector<1x32xf32> to vector<8x32xf32>
    %73 = arith.addf %70, %72 : vector<8x32xf32>
    %74 = arith.addf %13, %73 : vector<8x32xf32>
    %75 = arith.mulf %74, %74 : vector<8x32xf32>
    %76 = vector.shape_cast %75 : vector<8x32xf32> to vector<1x8x32xf32>
    %cst_33 = arith.constant dense<0.000000e+00> : vector<1xf32>
    %77 = vector.multi_reduction <add>, %76, %cst_33 [1, 2] : vector<1x8x32xf32> to vector<1xf32>
    %78 = vector.shape_cast %77 : vector<1xf32> to vector<1x1x1xf32>
    %79 = vector.extract %78[0, 0, 0] : f32 from vector<1x1x1xf32>
    %80 = arith.mulf %79, %2 : f32
    %81 = arith.mulf %3, %74 : vector<8x32xf32>
    %82 = math.rsqrt %80 : f32
    %83 = vector.broadcast %82 : f32 to vector<8x32xf32>
    %84 = arith.mulf %81, %83 : vector<8x32xf32>
    %c0_34 = arith.constant 0 : index
    %c0_35 = arith.constant 0 : index
    %85 = vector.load %arg9[%c0_34, %c0_35] : memref<32x32xf32, #tpu.memory_space<vmem>>, vector<32x32xf32>
    %cst_36 = arith.constant dense<0.000000e+00> : vector<8x32xf32>
    %86 = tpu.matmul %84, %85, %cst_36 {dimension_numbers = #tpu.dot_dimension_numbers<[1], [0], [0], [1], [0, 0, 1, 1], [], []>} : vector<8x32xf32>, vector<32x32xf32>, vector<8x32xf32> -> vector<8x32xf32>
    %c0_37 = arith.constant 0 : index
    %c0_38 = arith.constant 0 : index
    %87 = vector.load %arg10[%c0_37, %c0_38] : memref<1x32xf32, #tpu.memory_space<vmem>>, vector<1x32xf32>
    %88 = vector.broadcast %87 : vector<1x32xf32> to vector<8x32xf32>
    %89 = arith.addf %86, %88 : vector<8x32xf32>
    %c0_39 = arith.constant 0 : index
    %c0_40 = arith.constant 0 : index
    %90 = vector.load %arg11[%c0_39, %c0_40] : memref<32x32xf32, #tpu.memory_space<vmem>>, vector<32x32xf32>
    %cst_41 = arith.constant dense<0.000000e+00> : vector<8x32xf32>
    %91 = tpu.matmul %89, %90, %cst_41 {dimension_numbers = #tpu.dot_dimension_numbers<[1], [0], [0], [1], [0, 0, 1, 1], [], []>} : vector<8x32xf32>, vector<32x32xf32>, vector<8x32xf32> -> vector<8x32xf32>
    %c0_42 = arith.constant 0 : index
    %c0_43 = arith.constant 0 : index
    %92 = vector.load %arg12[%c0_42, %c0_43] : memref<1x32xf32, #tpu.memory_space<vmem>>, vector<1x32xf32>
    %93 = vector.broadcast %92 : vector<1x32xf32> to vector<8x32xf32>
    %94 = arith.addf %91, %93 : vector<8x32xf32>
    %c0_44 = arith.constant 0 : index
    %c0_45 = arith.constant 0 : index
    %95 = vector.load %arg13[%c0_44, %c0_45] : memref<32x32xf32, #tpu.memory_space<vmem>>, vector<32x32xf32>
    %cst_46 = arith.constant dense<0.000000e+00> : vector<8x32xf32>
    %96 = tpu.matmul %89, %95, %cst_46 {dimension_numbers = #tpu.dot_dimension_numbers<[1], [0], [0], [1], [0, 0, 1, 1], [], []>} : vector<8x32xf32>, vector<32x32xf32>, vector<8x32xf32> -> vector<8x32xf32>
    %c0_47 = arith.constant 0 : index
    %c0_48 = arith.constant 0 : index
    %97 = vector.load %arg14[%c0_47, %c0_48] : memref<1x32xf32, #tpu.memory_space<vmem>>, vector<1x32xf32>
    %98 = vector.broadcast %97 : vector<1x32xf32> to vector<8x32xf32>
    %99 = arith.addf %96, %98 : vector<8x32xf32>
    %c0_49 = arith.constant 0 : index
    %100 = memref.load %arg15[%c0_49] : memref<1xf32, #tpu.memory_space<smem>>
    %101 = vector.broadcast %100 : f32 to vector<8x32xf32>
    %102 = arith.mulf %101, %94 : vector<8x32xf32>
    %cst_50 = arith.constant 0.000000e+00 : f32
    %103 = vector.broadcast %cst_50 : f32 to vector<8x32xf32>
    %104 = arith.subf %103, %102 : vector<8x32xf32>
    %105 = math.exp %104 : vector<8x32xf32>
    %cst_51 = arith.constant 1.000000e+00 : f32
    %106 = vector.broadcast %cst_51 : f32 to vector<8x32xf32>
    %107 = arith.addf %106, %105 : vector<8x32xf32>
    %cst_52 = arith.constant 1.000000e+00 : f32
    %108 = vector.broadcast %cst_52 : f32 to vector<8x32xf32>
    %109 = arith.divf %108, %107 : vector<8x32xf32>
    %110 = arith.mulf %94, %109 : vector<8x32xf32>
    %111 = arith.mulf %110, %99 : vector<8x32xf32>
    %112 = arith.addf %84, %111 : vector<8x32xf32>
    %c0_53 = arith.constant 0 : index
    %c0_54 = arith.constant 0 : index
    %113 = vector.load %arg16[%c0_53, %c0_54] : memref<32x64xf32, #tpu.memory_space<vmem>>, vector<32x64xf32>
    %cst_55 = arith.constant dense<0.000000e+00> : vector<8x64xf32>
    %114 = tpu.matmul %112, %113, %cst_55 {dimension_numbers = #tpu.dot_dimension_numbers<[1], [0], [0], [1], [0, 0, 1, 1], [], []>} : vector<8x32xf32>, vector<32x64xf32>, vector<8x64xf32> -> vector<8x64xf32>
    %c0_56 = arith.constant 0 : index
    %c0_57 = arith.constant 0 : index
    %115 = vector.load %arg17[%c0_56, %c0_57] : memref<1x64xf32, #tpu.memory_space<vmem>>, vector<1x64xf32>
    %116 = vector.broadcast %115 : vector<1x64xf32> to vector<8x64xf32>
    %117 = arith.addf %114, %116 : vector<8x64xf32>
    %118 = vector.shape_cast %117 : vector<8x64xf32> to vector<1x8x64xf32>
    %c0_58 = arith.constant 0 : index
    %c0_59 = arith.constant 0 : index
    %c0_60 = arith.constant 0 : index
    %119 = vector.load %arg18[%c0_58, %c0_59, %c0_60] : memref<1x8x64xf32, #tpu.memory_space<vmem>>, vector<1x8x64xf32>
    tpu.vector_store %arg18[%c0_58, %c0_59, %c0_60], %118 {strides = array<i32>} : memref<1x8x64xf32, #tpu.memory_space<vmem>>, vector<1x8x64xf32>,
    return
  }
  func.func @transform_0(%arg0: i32) -> (i32, i32, i32) {
    %c0_i32 = arith.constant 0 : i32
    %c0_i32_0 = arith.constant 0 : i32
    %c0_i32_1 = arith.constant 0 : i32
    return %arg0, %c0_i32, %c0_i32_0 : i32, i32, i32
  }
  func.func @transform_1(%arg0: i32) -> (i32, i32) {
    %c0_i32 = arith.constant 0 : i32
    %c0_i32_0 = arith.constant 0 : i32
    %c0_i32_1 = arith.constant 0 : i32
    return %c0_i32, %c0_i32_0 : i32, i32
  }
  func.func @transform_2(%arg0: i32) -> (i32, i32) {
    %c0_i32 = arith.constant 0 : i32
    %c0_i32_0 = arith.constant 0 : i32
    %c0_i32_1 = arith.constant 0 : i32
    return %c0_i32, %c0_i32_0 : i32, i32
  }
  func.func @transform_3(%arg0: i32) -> (i32, i32) {
    %c0_i32 = arith.constant 0 : i32
    %c0_i32_0 = arith.constant 0 : i32
    %c0_i32_1 = arith.constant 0 : i32
    return %c0_i32, %c0_i32_0 : i32, i32
  }
  func.func @transform_4(%arg0: i32) -> (i32, i32) {
    %c0_i32 = arith.constant 0 : i32
    %c0_i32_0 = arith.constant 0 : i32
    %c0_i32_1 = arith.constant 0 : i32
    return %c0_i32, %c0_i32_0 : i32, i32
  }
  func.func @transform_5(%arg0: i32) -> (i32, i32) {
    %c0_i32 = arith.constant 0 : i32
    %c0_i32_0 = arith.constant 0 : i32
    %c0_i32_1 = arith.constant 0 : i32
    return %c0_i32, %c0_i32_0 : i32, i32
  }
  func.func @transform_6(%arg0: i32) -> (i32, i32) {
    %c0_i32 = arith.constant 0 : i32
    %c0_i32_0 = arith.constant 0 : i32
    %c0_i32_1 = arith.constant 0 : i32
    return %c0_i32, %c0_i32_0 : i32, i32
  }
  func.func @transform_7(%arg0: i32) -> (i32, i32) {
    %c0_i32 = arith.constant 0 : i32
    %c0_i32_0 = arith.constant 0 : i32
    %c0_i32_1 = arith.constant 0 : i32
    return %c0_i32, %c0_i32_0 : i32, i32
  }
  func.func @transform_8(%arg0: i32) -> (i32, i32) {
    %c0_i32 = arith.constant 0 : i32
    %c0_i32_0 = arith.constant 0 : i32
    %c0_i32_1 = arith.constant 0 : i32
    return %c0_i32, %c0_i32_0 : i32, i32
  }
  func.func @transform_9(%arg0: i32) -> (i32, i32) {
    %c0_i32 = arith.constant 0 : i32
    %c0_i32_0 = arith.constant 0 : i32
    %c0_i32_1 = arith.constant 0 : i32
    return %c0_i32, %c0_i32_0 : i32, i32
  }
  func.func @transform_10(%arg0: i32) -> (i32, i32) {
    %c0_i32 = arith.constant 0 : i32
    %c0_i32_0 = arith.constant 0 : i32
    %c0_i32_1 = arith.constant 0 : i32
    return %c0_i32, %c0_i32_0 : i32, i32
  }
  func.func @transform_11(%arg0: i32) -> (i32, i32) {
    %c0_i32 = arith.constant 0 : i32
    %c0_i32_0 = arith.constant 0 : i32
    %c0_i32_1 = arith.constant 0 : i32
    return %c0_i32, %c0_i32_0 : i32, i32
  }
  func.func @transform_12(%arg0: i32) -> (i32, i32) {
    %c0_i32 = arith.constant 0 : i32
    %c0_i32_0 = arith.constant 0 : i32
    %c0_i32_1 = arith.constant 0 : i32
    return %c0_i32, %c0_i32_0 : i32, i32
  }
  func.func @transform_13(%arg0: i32) -> (i32, i32) {
    %c0_i32 = arith.constant 0 : i32
    %c0_i32_0 = arith.constant 0 : i32
    %c0_i32_1 = arith.constant 0 : i32
    return %c0_i32, %c0_i32_0 : i32, i32
  }
  func.func @transform_14(%arg0: i32) -> i32 {
    %c0_i32 = arith.constant 0 : i32
    %c0_i32_0 = arith.constant 0 : i32
    return %c0_i32 : i32
  }
  func.func @transform_15(%arg0: i32) -> (i32, i32) {
    %c0_i32 = arith.constant 0 : i32
    %c0_i32_0 = arith.constant 0 : i32
    %c0_i32_1 = arith.constant 0 : i32
    return %c0_i32, %c0_i32_0 : i32, i32
  }
  func.func @transform_16(%arg0: i32) -> (i32, i32) {
    %c0_i32 = arith.constant 0 : i32
    %c0_i32_0 = arith.constant 0 : i32
    %c0_i32_1 = arith.constant 0 : i32
    return %c0_i32, %c0_i32_0 : i32, i32
  }
  func.func @transform_17(%arg0: i32) -> (i32, i32, i32) {
    %c0_i32 = arith.constant 0 : i32
    %c0_i32_0 = arith.constant 0 : i32
    %c0_i32_1 = arith.constant 0 : i32
    return %arg0, %c0_i32, %c0_i32_0 : i32, i32, i32
  }
}

</mosaic_0001>

<llo_original>
// kernel: tpu_custom_call.1
$region0: #{tpu_custom_call.1}
  #allocation0 [shape = 'u32[]', space=smem, size = 0x4, offset = 0x4, fixed_abs, tag = 'smem constant byte address 0x4 - core index']
  #allocation1 [shape = 'u32[144,128]{1,0:T(1,128)}', space=vmem, size = 0x12000, scoped, tag = 'internal scratch']
  #allocation2 [shape = 'f32[1]{0:T(128)S(6)}', space=smem, size = 0x200, scoped, tag = 'scoped memory for tpu_custom_call.1']
  %s0 = inlined_call_operand.hbm [shape: f32[2,8,32], index: 0, kind: input, shape index: {}]
  %s1 = inlined_call_operand.hbm [shape: f32[8,32], index: 1, kind: input, shape index: {}]
  %s2 = inlined_call_operand.vmem [shape: f32[32,192], index: 2, kind: input, shape index: {}]
  %s3 = inlined_call_operand.hbm [shape: f32[8,128], index: 3, kind: input, shape index: {}]
  %s4 = inlined_call_operand.hbm [shape: f32[8,128], index: 4, kind: input, shape index: {}]
  %s5 = inlined_call_operand.hbm [shape: f32[128,128], index: 5, kind: input, shape index: {}]
  %s6 = inlined_call_operand.vmem [shape: f32[64,32], index: 6, kind: input, shape index: {}]
  %s7 = inlined_call_operand.vmem [shape: f32[1,32], index: 7, kind: input, shape index: {}]
  %s8 = inlined_call_operand.vmem [shape: f32[32,32], index: 8, kind: input, shape index: {}]
  %s9 = inlined_call_operand.vmem [shape: f32[1,32], index: 9, kind: input, shape index: {}]
  %s10 = inlined_call_operand.vmem [shape: f32[32,32], index: 10, kind: input, shape index: {}]
  %s11 = inlined_call_operand.vmem [shape: f32[1,32], index: 11, kind: input, shape index: {}]
  %s12 = inlined_call_operand.hbm [shape: f32[32,32], index: 12, kind: input, shape index: {}]
  %s13 = inlined_call_operand.vmem [shape: f32[1,32], index: 13, kind: input, shape index: {}]
  %s14 = inlined_call_operand.<no memory space> [shape: f32[1], index: 14, kind: input, shape index: {}]
  %s15 = inlined_call_operand.hbm [shape: f32[32,64], index: 15, kind: input, shape index: {}]
  %s16 = inlined_call_operand.vmem [shape: f32[1,64], index: 16, kind: input, shape index: {}]
  %s17 = inlined_call_operand.hbm [shape: f32[2,8,64], index: 17, kind: output, shape index: {}]
  %s18 = sld [smem:[#allocation0]]
  $region129: #{tpu_custom_call.1} parent=0
    _
  %s20 = ssub.s32 1, %s18
  %s21 = scalar_select 0, %s20, %s18
  %22 = sst [smem:[#allocation2]] %s14
  $region1: #{tpu_custom_call.1} parent=0
    #allocation3 [shape = 'u8[8192]{0}', space=vmem, size = 0x2000, scoped, tag = 'input window, operand 0']
    #allocation4 [shape = 's32[2]{0}', space=sflag, size = 0x8, scoped, tag = 'scoped memory for tpu_custom_call.1']
    #allocation5 [shape = 's32[2]{0}', space=sflag, size = 0x8, scoped, tag = 'scoped memory for tpu_custom_call.1']
    #allocation6 [shape = 'u8[4096]{0}', space=vmem, size = 0x1000, scoped, tag = 'input window, operand 1, single buffered']
    #allocation7 [shape = 's32[1]{0}', space=sflag, size = 0x4, scoped, tag = 'scoped memory for tpu_custom_call.1']
    #allocation8 [shape = 'u8[4096]{0}', space=vmem, size = 0x1000, scoped, tag = 'input window, operand 3, single buffered']
    #allocation9 [shape = 'u8[4096]{0}', space=vmem, size = 0x1000, scoped, tag = 'input window, operand 4, single buffered']
    #allocation10 [shape = 's32[1]{0}', space=sflag, size = 0x4, scoped, tag = 'scoped memory for tpu_custom_call.1']
    #allocation11 [shape = 'u8[65536]{0}', space=vmem, size = 0x10000, scoped, tag = 'input window, operand 5, single buffered']
    #allocation12 [shape = 'u8[16384]{0}', space=vmem, size = 0x4000, scoped, tag = 'input window, operand 12, single buffered']
    #allocation13 [shape = 's32[1]{0}', space=sflag, size = 0x4, scoped, tag = 'scoped memory for tpu_custom_call.1']
    #allocation14 [shape = 'u8[16384]{0}', space=vmem, size = 0x4000, scoped, tag = 'input window, operand 15, single buffered']
    #allocation15 [shape = 'u8[8192]{0}', space=vmem, size = 0x2000, scoped, tag = 'output window, operand 0']
    %23 = vsyncpa [#allocation4], 0
    %s24 = scalar_lea.sflag [#allocation4], 1
    %25 = vsyncpa %s24, 0
    %26 = vsyncpa [#allocation7], 0
    %27 = vsyncpa [#allocation10], 0
    %28 = vsyncpa [#allocation13], 0
    %29 = vsyncpa [#allocation5], 0
    %s30 = scalar_lea.sflag [#allocation5], 1
    %31 = vsyncpa %s30, 0
    loop: start=0, step=1, limit=4
    $region2: #{tpu_custom_call.1} parent=1 // loop_pre_header
      _
    $region3: #{tpu_custom_call.1} parent=1 // loop_header
      %s33 = sphi 0, %s37
      %p34 = scmp.ge.s32.totalorder %s33, 4
      %s43 = sphi 0, %s45
      %s46 = sphi 0, %s43
      %s47 = sphi 0, %s46
      %s63 = sphi 0, %s47
      %s67 = sphi 0, %s67
      %s69 = sphi 0, %s67
      %s70 = sphi 0, %s69
      %s84 = sphi 0, %s70
      %s88 = sphi 0, %s88
      %s90 = sphi 0, %s88
      %s91 = sphi 0, %s90
      %s105 = sphi 0, %s91
      %s109 = sphi 0, %s109
      %s111 = sphi 0, %s109
      %s112 = sphi 0, %s111
      %s126 = sphi 0, %s112
      %s130 = sphi 0, %s130
      %s132 = sphi 0, %s130
      %s133 = sphi 0, %s132
      %s147 = sphi 0, %s133
      %s151 = sphi 0, %s151
      %s153 = sphi 0, %s151
      %s154 = sphi 0, %s153
      %s168 = sphi 0, %s154
      %s172 = sphi 0, %s172
      %s174 = sphi 0, %s172
      %s175 = sphi 0, %s174
      %s189 = sphi 0, %s175
      %s193 = sphi 0, %s193
      %s195 = sphi 0, %s193
      %s196 = sphi 0, %s195
      %s210 = sphi 0, %s196
      %s214 = sphi 0, %s214
      %s216 = sphi 0, %s214
      %s217 = sphi 0, %s216
      %s231 = sphi 0, %s217
      %s235 = sphi 0, %s235
      %s237 = sphi 0, %s235
      %s238 = sphi 0, %s237
      %s252 = sphi 0, %s238
      %s256 = sphi 0, %s256
      %s258 = sphi 0, %s256
      %s259 = sphi 0, %s258
      %s273 = sphi 0, %s259
      %s277 = sphi 0, %s277
      %s279 = sphi 0, %s277
      %s280 = sphi 0, %s279
      %s294 = sphi 0, %s280
      %s298 = sphi 0, %s298
      %s300 = sphi 0, %s298
      %s301 = sphi 0, %s300
      %s315 = sphi 0, %s301
      %s319 = sphi 0, %s319
      %s321 = sphi 0, %s319
      %s322 = sphi 0, %s321
      %s336 = sphi 0, %s322
      %s340 = sphi 0, %s340
      %s342 = sphi 0, %s340
      %s343 = sphi 0, %s342
      %s357 = sphi 0, %s343
      %s361 = sphi 0, %s361
      %s363 = sphi 0, %s361
      %s364 = sphi 0, %s363
      %s378 = sphi 0, %s364
      %s382 = sphi 0, %s382
      %s384 = sphi 0, %s382
      %s385 = sphi 0, %s384
      %s399 = sphi 0, %s385
      %s405 = sphi 0, %s407
      %s408 = sphi 0, %s405
      %s409 = sphi 0, %s408
      %s425 = sphi 0, %s409
    $region4: #{tpu_custom_call.1} parent=1 // loop_header_branch
      %36 = sbr.rel (%p34) target = $region8
    $region5: #{tpu_custom_call.1} parent=1 // loop_body
      %s38 = ssub.s32 %s33, 1
      %s39 = ssub.s32 %s33, 2
      %s40 = sadd.s32 %s33, 1
      %s41 = ssub.s32 %s33, %s40
      %p42 = scmp.eq.s32.totalorder %s41, 0
      %s44 = sadd.s32 %s43, 1
      %s45 = scalar_select %p42, %s43, %s44
      %p48 = pneg %p42
      %p49 = scmp.eq.s32.totalorder %s33, 1
      %p50 = por %p48, %p49
      %p51 = scmp.ne.s32.totalorder %s43, %s46
      %p52 = scmp.eq.s32.totalorder %s33, 0
      %p53 = por %p51, %p52
      %p54 = scmp.ne.s32.totalorder %s43, %s46
      %p55 = scmp.eq.s32.totalorder %s38, 1
      %p56 = por %p54, %p55
      %p57 = scmp.ne.s32.totalorder %s46, %s47
      %p58 = scmp.eq.s32.totalorder %s38, 0
      %p59 = por %p57, %p58
      %p60 = scmp.ne.s32.totalorder %s46, %s47
      %p61 = scmp.eq.s32.totalorder %s39, 1
      %p62 = por %p60, %p61
      %p64 = scmp.ne.s32.totalorder %s47, %s63
      %p65 = scmp.eq.s32.totalorder %s39, 0
      %p66 = por %p64, %p65
      %s68 = sadd.s32 %s67, 1
      %p71 = scmp.eq.s32.totalorder %s33, 1
      %p72 = scmp.ne.s32.totalorder %s67, %s69
      %p73 = scmp.eq.s32.totalorder %s33, 0
      %p74 = por %p72, %p73
      %p75 = scmp.ne.s32.totalorder %s67, %s69
      %p76 = scmp.eq.s32.totalorder %s38, 1
      %p77 = por %p75, %p76
      %p78 = scmp.ne.s32.totalorder %s69, %s70
      %p79 = scmp.eq.s32.totalorder %s38, 0
      %p80 = por %p78, %p79
      %p81 = scmp.ne.s32.totalorder %s69, %s70
      %p82 = scmp.eq.s32.totalorder %s39, 1
      %p83 = por %p81, %p82
      %p85 = scmp.ne.s32.totalorder %s70, %s84
      %p86 = scmp.eq.s32.totalorder %s39, 0
      %p87 = por %p85, %p86
      %s89 = sadd.s32 %s88, 1
      %p92 = scmp.eq.s32.totalorder %s33, 1
      %p93 = scmp.ne.s32.totalorder %s88, %s90
      %p94 = scmp.eq.s32.totalorder %s33, 0
      %p95 = por %p93, %p94
      %p96 = scmp.ne.s32.totalorder %s88, %s90
      %p97 = scmp.eq.s32.totalorder %s38, 1
      %p98 = por %p96, %p97
      %p99 = scmp.ne.s32.totalorder %s90, %s91
      %p100 = scmp.eq.s32.totalorder %s38, 0
      %p101 = por %p99, %p100
      %p102 = scmp.ne.s32.totalorder %s90, %s91
      %p103 = scmp.eq.s32.totalorder %s39, 1
      %p104 = por %p102, %p103
      %p106 = scmp.ne.s32.totalorder %s91, %s105
      %p107 = scmp.eq.s32.totalorder %s39, 0
      %p108 = por %p106, %p107
      %s110 = sadd.s32 %s109, 1
      %p113 = scmp.eq.s32.totalorder %s33, 1
      %p114 = scmp.ne.s32.totalorder %s109, %s111
      %p115 = scmp.eq.s32.totalorder %s33, 0
      %p116 = por %p114, %p115
      %p117 = scmp.ne.s32.totalorder %s109, %s111
      %p118 = scmp.eq.s32.totalorder %s38, 1
      %p119 = por %p117, %p118
      %p120 = scmp.ne.s32.totalorder %s111, %s112
      %p121 = scmp.eq.s32.totalorder %s38, 0
      %p122 = por %p120, %p121
      %p123 = scmp.ne.s32.totalorder %s111, %s112
      %p124 = scmp.eq.s32.totalorder %s39, 1
      %p125 = por %p123, %p124
      %p127 = scmp.ne.s32.totalorder %s112, %s126
      %p128 = scmp.eq.s32.totalorder %s39, 0
      %p129 = por %p127, %p128
      %s131 = sadd.s32 %s130, 1
      %p134 = scmp.eq.s32.totalorder %s33, 1
      %p135 = scmp.ne.s32.totalorder %s130, %s132
      %p136 = scmp.eq.s32.totalorder %s33, 0
      %p137 = por %p135, %p136
      %p138 = scmp.ne.s32.totalorder %s130, %s132
      %p139 = scmp.eq.s32.totalorder %s38, 1
      %p140 = por %p138, %p139
      %p141 = scmp.ne.s32.totalorder %s132, %s133
      %p142 = scmp.eq.s32.totalorder %s38, 0
      %p143 = por %p141, %p142
      %p144 = scmp.ne.s32.totalorder %s132, %s133
      %p145 = scmp.eq.s32.totalorder %s39, 1
      %p146 = por %p144, %p145
      %p148 = scmp.ne.s32.totalorder %s133, %s147
      %p149 = scmp.eq.s32.totalorder %s39, 0
      %p150 = por %p148, %p149
      %s152 = sadd.s32 %s151, 1
      %p155 = scmp.eq.s32.totalorder %s33, 1
      %p156 = scmp.ne.s32.totalorder %s151, %s153
      %p157 = scmp.eq.s32.totalorder %s33, 0
      %p158 = por %p156, %p157
      %p159 = scmp.ne.s32.totalorder %s151, %s153
      %p160 = scmp.eq.s32.totalorder %s38, 1
      %p161 = por %p159, %p160
      %p162 = scmp.ne.s32.totalorder %s153, %s154
      %p163 = scmp.eq.s32.totalorder %s38, 0
      %p164 = por %p162, %p163
      %p165 = scmp.ne.s32.totalorder %s153, %s154
      %p166 = scmp.eq.s32.totalorder %s39, 1
      %p167 = por %p165, %p166
      %p169 = scmp.ne.s32.totalorder %s154, %s168
      %p170 = scmp.eq.s32.totalorder %s39, 0
      %p171 = por %p169, %p170
      %s173 = sadd.s32 %s172, 1
      %p176 = scmp.eq.s32.totalorder %s33, 1
      %p177 = scmp.ne.s32.totalorder %s172, %s174
      %p178 = scmp.eq.s32.totalorder %s33, 0
      %p179 = por %p177, %p178
      %p180 = scmp.ne.s32.totalorder %s172, %s174
      %p181 = scmp.eq.s32.totalorder %s38, 1
      %p182 = por %p180, %p181
      %p183 = scmp.ne.s32.totalorder %s174, %s175
      %p184 = scmp.eq.s32.totalorder %s38, 0
      %p185 = por %p183, %p184
      %p186 = scmp.ne.s32.totalorder %s174, %s175
      %p187 = scmp.eq.s32.totalorder %s39, 1
      %p188 = por %p186, %p187
      %p190 = scmp.ne.s32.totalorder %s175, %s189
      %p191 = scmp.eq.s32.totalorder %s39, 0
      %p192 = por %p190, %p191
      %s194 = sadd.s32 %s193, 1
      %p197 = scmp.eq.s32.totalorder %s33, 1
      %p198 = scmp.ne.s32.totalorder %s193, %s195
      %p199 = scmp.eq.s32.totalorder %s33, 0
      %p200 = por %p198, %p199
      %p201 = scmp.ne.s32.totalorder %s193, %s195
      %p202 = scmp.eq.s32.totalorder %s38, 1
      %p203 = por %p201, %p202
      %p204 = scmp.ne.s32.totalorder %s195, %s196
      %p205 = scmp.eq.s32.totalorder %s38, 0
      %p206 = por %p204, %p205
      %p207 = scmp.ne.s32.totalorder %s195, %s196
      %p208 = scmp.eq.s32.totalorder %s39, 1
      %p209 = por %p207, %p208
      %p211 = scmp.ne.s32.totalorder %s196, %s210
      %p212 = scmp.eq.s32.totalorder %s39, 0
      %p213 = por %p211, %p212
      %s215 = sadd.s32 %s214, 1
      %p218 = scmp.eq.s32.totalorder %s33, 1
      %p219 = scmp.ne.s32.totalorder %s214, %s216
      %p220 = scmp.eq.s32.totalorder %s33, 0
      %p221 = por %p219, %p220
      %p222 = scmp.ne.s32.totalorder %s214, %s216
      %p223 = scmp.eq.s32.totalorder %s38, 1
      %p224 = por %p222, %p223
      %p225 = scmp.ne.s32.totalorder %s216, %s217
      %p226 = scmp.eq.s32.totalorder %s38, 0
      %p227 = por %p225, %p226
      %p228 = scmp.ne.s32.totalorder %s216, %s217
      %p229 = scmp.eq.s32.totalorder %s39, 1
      %p230 = por %p228, %p229
      %p232 = scmp.ne.s32.totalorder %s217, %s231
      %p233 = scmp.eq.s32.totalorder %s39, 0
      %p234 = por %p232, %p233
      %s236 = sadd.s32 %s235, 1
      %p239 = scmp.eq.s32.totalorder %s33, 1
      %p240 = scmp.ne.s32.totalorder %s235, %s237
      %p241 = scmp.eq.s32.totalorder %s33, 0
      %p242 = por %p240, %p241
      %p243 = scmp.ne.s32.totalorder %s235, %s237
      %p244 = scmp.eq.s32.totalorder %s38, 1
      %p245 = por %p243, %p244
      %p246 = scmp.ne.s32.totalorder %s237, %s238
      %p247 = scmp.eq.s32.totalorder %s38, 0
      %p248 = por %p246, %p247
      %p249 = scmp.ne.s32.totalorder %s237, %s238
      %p250 = scmp.eq.s32.totalorder %s39, 1
      %p251 = por %p249, %p250
      %p253 = scmp.ne.s32.totalorder %s238, %s252
      %p254 = scmp.eq.s32.totalorder %s39, 0
      %p255 = por %p253, %p254
      %s257 = sadd.s32 %s256, 1
      %p260 = scmp.eq.s32.totalorder %s33, 1
      %p261 = scmp.ne.s32.totalorder %s256, %s258
      %p262 = scmp.eq.s32.totalorder %s33, 0
      %p263 = por %p261, %p262
      %p264 = scmp.ne.s32.totalorder %s256, %s258
      %p265 = scmp.eq.s32.totalorder %s38, 1
      %p266 = por %p264, %p265
      %p267 = scmp.ne.s32.totalorder %s258, %s259
      %p268 = scmp.eq.s32.totalorder %s38, 0
      %p269 = por %p267, %p268
      %p270 = scmp.ne.s32.totalorder %s258, %s259
      %p271 = scmp.eq.s32.totalorder %s39, 1
      %p272 = por %p270, %p271
      %p274 = scmp.ne.s32.totalorder %s259, %s273
      %p275 = scmp.eq.s32.totalorder %s39, 0
      %p276 = por %p274, %p275
      %s278 = sadd.s32 %s277, 1
      %p281 = scmp.eq.s32.totalorder %s33, 1
      %p282 = scmp.ne.s32.totalorder %s277, %s279
      %p283 = scmp.eq.s32.totalorder %s33, 0
      %p284 = por %p282, %p283
      %p285 = scmp.ne.s32.totalorder %s277, %s279
      %p286 = scmp.eq.s32.totalorder %s38, 1
      %p287 = por %p285, %p286
      %p288 = scmp.ne.s32.totalorder %s279, %s280
      %p289 = scmp.eq.s32.totalorder %s38, 0
      %p290 = por %p288, %p289
      %p291 = scmp.ne.s32.totalorder %s279, %s280
      %p292 = scmp.eq.s32.totalorder %s39, 1
      %p293 = por %p291, %p292
      %p295 = scmp.ne.s32.totalorder %s280, %s294
      %p296 = scmp.eq.s32.totalorder %s39, 0
      %p297 = por %p295, %p296
      %s299 = sadd.s32 %s298, 1
      %p302 = scmp.eq.s32.totalorder %s33, 1
      %p303 = scmp.ne.s32.totalorder %s298, %s300
      %p304 = scmp.eq.s32.totalorder %s33, 0
      %p305 = por %p303, %p304
      %p306 = scmp.ne.s32.totalorder %s298, %s300
      %p307 = scmp.eq.s32.totalorder %s38, 1
      %p308 = por %p306, %p307
      %p309 = scmp.ne.s32.totalorder %s300, %s301
      %p310 = scmp.eq.s32.totalorder %s38, 0
      %p311 = por %p309, %p310
      %p312 = scmp.ne.s32.totalorder %s300, %s301
      %p313 = scmp.eq.s32.totalorder %s39, 1
      %p314 = por %p312, %p313
      %p316 = scmp.ne.s32.totalorder %s301, %s315
      %p317 = scmp.eq.s32.totalorder %s39, 0
      %p318 = por %p316, %p317
      %s320 = sadd.s32 %s319, 1
      %p323 = scmp.eq.s32.totalorder %s33, 1
      %p324 = scmp.ne.s32.totalorder %s319, %s321
      %p325 = scmp.eq.s32.totalorder %s33, 0
      %p326 = por %p324, %p325
      %p327 = scmp.ne.s32.totalorder %s319, %s321
      %p328 = scmp.eq.s32.totalorder %s38, 1
      %p329 = por %p327, %p328
      %p330 = scmp.ne.s32.totalorder %s321, %s322
      %p331 = scmp.eq.s32.totalorder %s38, 0
      %p332 = por %p330, %p331
      %p333 = scmp.ne.s32.totalorder %s321, %s322
      %p334 = scmp.eq.s32.totalorder %s39, 1
      %p335 = por %p333, %p334
      %p337 = scmp.ne.s32.totalorder %s322, %s336
      %p338 = scmp.eq.s32.totalorder %s39, 0
      %p339 = por %p337, %p338
      %s341 = sadd.s32 %s340, 1
      %p344 = scmp.eq.s32.totalorder %s33, 1
      %p345 = scmp.ne.s32.totalorder %s340, %s342
      %p346 = scmp.eq.s32.totalorder %s33, 0
      %p347 = por %p345, %p346
      %p348 = scmp.ne.s32.totalorder %s340, %s342
      %p349 = scmp.eq.s32.totalorder %s38, 1
      %p350 = por %p348, %p349
      %p351 = scmp.ne.s32.totalorder %s342, %s343
      %p352 = scmp.eq.s32.totalorder %s38, 0
      %p353 = por %p351, %p352
      %p354 = scmp.ne.s32.totalorder %s342, %s343
      %p355 = scmp.eq.s32.totalorder %s39, 1
      %p356 = por %p354, %p355
      %p358 = scmp.ne.s32.totalorder %s343, %s357
      %p359 = scmp.eq.s32.totalorder %s39, 0
      %p360 = por %p358, %p359
      %s362 = sadd.s32 %s361, 1
      %p365 = scmp.eq.s32.totalorder %s33, 1
      %p366 = scmp.ne.s32.totalorder %s361, %s363
      %p367 = scmp.eq.s32.totalorder %s33, 0
      %p368 = por %p366, %p367
      %p369 = scmp.ne.s32.totalorder %s361, %s363
      %p370 = scmp.eq.s32.totalorder %s38, 1
      %p371 = por %p369, %p370
      %p372 = scmp.ne.s32.totalorder %s363, %s364
      %p373 = scmp.eq.s32.totalorder %s38, 0
      %p374 = por %p372, %p373
      %p375 = scmp.ne.s32.totalorder %s363, %s364
      %p376 = scmp.eq.s32.totalorder %s39, 1
      %p377 = por %p375, %p376
      %p379 = scmp.ne.s32.totalorder %s364, %s378
      %p380 = scmp.eq.s32.totalorder %s39, 0
      %p381 = por %p379, %p380
      %s383 = sadd.s32 %s382, 1
      %p386 = scmp.eq.s32.totalorder %s33, 1
      %p387 = scmp.ne.s32.totalorder %s382, %s384
      %p388 = scmp.eq.s32.totalorder %s33, 0
      %p389 = por %p387, %p388
      %p390 = scmp.ne.s32.totalorder %s382, %s384
      %p391 = scmp.eq.s32.totalorder %s38, 1
      %p392 = por %p390, %p391
      %p393 = scmp.ne.s32.totalorder %s384, %s385
      %p394 = scmp.eq.s32.totalorder %s38, 0
      %p395 = por %p393, %p394
      %p396 = scmp.ne.s32.totalorder %s384, %s385
      %p397 = scmp.eq.s32.totalorder %s39, 1
      %p398 = por %p396, %p397
      %p400 = scmp.ne.s32.totalorder %s385, %s399
      %p401 = scmp.eq.s32.totalorder %s39, 0
      %p402 = por %p400, %p401
      %s403 = ssub.s32 %s33, %s40
      %p404 = scmp.eq.s32.totalorder %s403, 0
      %s406 = sadd.s32 %s405, 1
      %s407 = scalar_select %p404, %s405, %s406
      %p410 = pneg %p404
      %p411 = scmp.eq.s32.totalorder %s33, 1
      %p412 = por %p410, %p411
      %p413 = scmp.ne.s32.totalorder %s405, %s408
      %p414 = scmp.eq.s32.totalorder %s33, 0
      %p415 = por %p413, %p414
      %p416 = scmp.ne.s32.totalorder %s405, %s408
      %p417 = scmp.eq.s32.totalorder %s38, 1
      %p418 = por %p416, %p417
      %p419 = scmp.ne.s32.totalorder %s408, %s409
      %p420 = scmp.eq.s32.totalorder %s38, 0
      %p421 = por %p419, %p420
      %p422 = scmp.ne.s32.totalorder %s408, %s409
      %p423 = scmp.eq.s32.totalorder %s39, 1
      %p424 = por %p422, %p423
      %p426 = scmp.ne.s32.totalorder %s409, %s425
      %p427 = scmp.eq.s32.totalorder %s39, 0
      %p428 = por %p426, %p427
      %p429 = scmp.le.s32.totalorder 1, %s33
      %p430 = scmp.lt.s32.totalorder %s33, 3
      %p431 = pnand %p429, %p430
      %p432 = pneg %p431
      // Predicated region
      $region9: #{tpu_custom_call.1} parent=5 // pred_check
        _
      $region10: #{tpu_custom_call.1} parent=5 // pred_check_branch
        %434 = sbr.rel (%p431) target = $region12
      $region11: #{tpu_custom_call.1} parent=5 // pred_region
        %s435 = ssub.s32 %s33, 1
        // Predicated region
        $region13: #{tpu_custom_call.1} parent=11 // pred_check
          %p436 = pneg %p80
        $region14: #{tpu_custom_call.1} parent=11 // pred_check_branch
          %438 = sbr.rel (%p436) target = $region16
        $region15: #{tpu_custom_call.1} parent=11 // pred_region
          %s440 = ssub.s32 128, 128
          %441 = vsyncadd [#allocation7], %s440
          %s443 = sshll.u32 [#allocation6], 4
          %s444 = int_to_ptr.vmem [resolvable:$true] %s443
          %446 = dma.hbm_to_vmem [thread:$0]  %s1, 128, %s444, [#allocation7]
        $region16: #{tpu_custom_call.1} parent=11 // pred_fallthru
          _
        // Predicated region
        $region17: #{tpu_custom_call.1} parent=11 // pred_check
          %p447 = pneg %p101
        $region18: #{tpu_custom_call.1} parent=11 // pred_check_branch
          %449 = sbr.rel (%p447) target = $region20
        $region19: #{tpu_custom_call.1} parent=11 // pred_region
          _
        $region20: #{tpu_custom_call.1} parent=11 // pred_fallthru
          _
        // Predicated region
        $region21: #{tpu_custom_call.1} parent=11 // pred_check
          %p450 = pneg %p122
        $region22: #{tpu_custom_call.1} parent=11 // pred_check_branch
          %452 = sbr.rel (%p450) target = $region24
        $region23: #{tpu_custom_call.1} parent=11 // pred_region
          %s454 = ssub.s32 128, 128
          %455 = vsyncadd [#allocation7], %s454
          %s457 = sshll.u32 [#allocation8], 4
          %s458 = int_to_ptr.vmem [resolvable:$true] %s457
          %460 = dma.hbm_to_vmem [thread:$0]  %s3, 128, %s458, [#allocation7]
        $region24: #{tpu_custom_call.1} parent=11 // pred_fallthru
          _
        // Predicated region
        $region25: #{tpu_custom_call.1} parent=11 // pred_check
          %p461 = pneg %p143
        $region26: #{tpu_custom_call.1} parent=11 // pred_check_branch
          %463 = sbr.rel (%p461) target = $region28
        $region27: #{tpu_custom_call.1} parent=11 // pred_region
          %s465 = ssub.s32 128, 128
          %466 = vsyncadd [#allocation10], %s465
          %s468 = sshll.u32 [#allocation9], 4
          %s469 = int_to_ptr.vmem [resolvable:$true] %s468
          %471 = dma.hbm_to_vmem [thread:$0]  %s4, 128, %s469, [#allocation10]
        $region28: #{tpu_custom_call.1} parent=11 // pred_fallthru
          _
        // Predicated region
        $region29: #{tpu_custom_call.1} parent=11 // pred_check
          %p472 = pneg %p164
        $region30: #{tpu_custom_call.1} parent=11 // pred_check_branch
          %474 = sbr.rel (%p472) target = $region32
        $region31: #{tpu_custom_call.1} parent=11 // pred_region
          %s476 = ssub.s32 2048, 2048
          %477 = vsyncadd [#allocation10], %s476
          %s478 = sshll.u32 [#allocation11], 4
          %s479 = int_to_ptr.vmem [resolvable:$true] %s478
          %484 = dma.hbm_to_vmem [thread:$0]  %s5, 2048, %s479, [#allocation10], 128, 128, 8
        $region32: #{tpu_custom_call.1} parent=11 // pred_fallthru
          _
        // Predicated region
        $region33: #{tpu_custom_call.1} parent=11 // pred_check
          %p485 = pneg %p185
        $region34: #{tpu_custom_call.1} parent=11 // pred_check_branch
          %487 = sbr.rel (%p485) target = $region36
        $region35: #{tpu_custom_call.1} parent=11 // pred_region
          _
        $region36: #{tpu_custom_call.1} parent=11 // pred_fallthru
          _
        // Predicated region
        $region37: #{tpu_custom_call.1} parent=11 // pred_check
          %p488 = pneg %p206
        $region38: #{tpu_custom_call.1} parent=11 // pred_check_branch
          %490 = sbr.rel (%p488) target = $region40
        $region39: #{tpu_custom_call.1} parent=11 // pred_region
          _
        $region40: #{tpu_custom_call.1} parent=11 // pred_fallthru
          _
        // Predicated region
        $region41: #{tpu_custom_call.1} parent=11 // pred_check
          %p491 = pneg %p227
        $region42: #{tpu_custom_call.1} parent=11 // pred_check_branch
          %493 = sbr.rel (%p491) target = $region44
        $region43: #{tpu_custom_call.1} parent=11 // pred_region
          _
        $region44: #{tpu_custom_call.1} parent=11 // pred_fallthru
          _
        // Predicated region
        $region45: #{tpu_custom_call.1} parent=11 // pred_check
          %p494 = pneg %p248
        $region46: #{tpu_custom_call.1} parent=11 // pred_check_branch
          %496 = sbr.rel (%p494) target = $region48
        $region47: #{tpu_custom_call.1} parent=11 // pred_region
          _
        $region48: #{tpu_custom_call.1} parent=11 // pred_fallthru
          _
        // Predicated region
        $region49: #{tpu_custom_call.1} parent=11 // pred_check
          %p497 = pneg %p269
        $region50: #{tpu_custom_call.1} parent=11 // pred_check_branch
          %499 = sbr.rel (%p497) target = $region52
        $region51: #{tpu_custom_call.1} parent=11 // pred_region
          _
        $region52: #{tpu_custom_call.1} parent=11 // pred_fallthru
          _
        // Predicated region
        $region53: #{tpu_custom_call.1} parent=11 // pred_check
          %p500 = pneg %p290
        $region54: #{tpu_custom_call.1} parent=11 // pred_check_branch
          %502 = sbr.rel (%p500) target = $region56
        $region55: #{tpu_custom_call.1} parent=11 // pred_region
          _
        $region56: #{tpu_custom_call.1} parent=11 // pred_fallthru
          _
        // Predicated region
        $region57: #{tpu_custom_call.1} parent=11 // pred_check
          %p503 = pneg %p311
        $region58: #{tpu_custom_call.1} parent=11 // pred_check_branch
          %505 = sbr.rel (%p503) target = $region60
        $region59: #{tpu_custom_call.1} parent=11 // pred_region
          %s507 = ssub.s32 512, 512
          %508 = vsyncadd [#allocation13], %s507
          %s509 = sshll.u32 [#allocation12], 4
          %s510 = int_to_ptr.vmem [resolvable:$true] %s509
          %515 = dma.hbm_to_vmem [thread:$0]  %s12, 512, %s510, [#allocation13], 128, 128, 8
        $region60: #{tpu_custom_call.1} parent=11 // pred_fallthru
          _
        // Predicated region
        $region61: #{tpu_custom_call.1} parent=11 // pred_check
          %p516 = pneg %p332
        $region62: #{tpu_custom_call.1} parent=11 // pred_check_branch
          %518 = sbr.rel (%p516) target = $region64
        $region63: #{tpu_custom_call.1} parent=11 // pred_region
          _
        $region64: #{tpu_custom_call.1} parent=11 // pred_fallthru
          _
        // Predicated region
        $region65: #{tpu_custom_call.1} parent=11 // pred_check
          %p519 = pneg %p353
        $region66: #{tpu_custom_call.1} parent=11 // pred_check_branch
          %521 = sbr.rel (%p519) target = $region68
        $region67: #{tpu_custom_call.1} parent=11 // pred_region
          _
        $region68: #{tpu_custom_call.1} parent=11 // pred_fallthru
          _
        // Predicated region
        $region69: #{tpu_custom_call.1} parent=11 // pred_check
          %p522 = pneg %p374
        $region70: #{tpu_custom_call.1} parent=11 // pred_check_branch
          %524 = sbr.rel (%p522) target = $region72
        $region71: #{tpu_custom_call.1} parent=11 // pred_region
          %s526 = ssub.s32 512, 512
          %527 = vsyncadd [#allocation13], %s526
          %s528 = sshll.u32 [#allocation14], 4
          %s529 = int_to_ptr.vmem [resolvable:$true] %s528
          %534 = dma.hbm_to_vmem [thread:$0]  %s15, 512, %s529, [#allocation13], 128, 128, 8
        $region72: #{tpu_custom_call.1} parent=11 // pred_fallthru
          _
        // Predicated region
        $region73: #{tpu_custom_call.1} parent=11 // pred_check
          %p535 = pneg %p395
        $region74: #{tpu_custom_call.1} parent=11 // pred_check_branch
          %537 = sbr.rel (%p535) target = $region76
        $region75: #{tpu_custom_call.1} parent=11 // pred_region
          _
        $region76: #{tpu_custom_call.1} parent=11 // pred_fallthru
          _
      $region12: #{tpu_custom_call.1} parent=5 // pred_fallthru
        _
      %p538 = scmp.lt.s32.totalorder %s33, 2
      // Predicated region
      $region77: #{tpu_custom_call.1} parent=5 // pred_check
        %p539 = pneg %p538
      $region78: #{tpu_custom_call.1} parent=5 // pred_check_branch
        %541 = sbr.rel (%p539) target = $region80
      $region79: #{tpu_custom_call.1} parent=5 // pred_region
        // Predicated region
        $region81: #{tpu_custom_call.1} parent=79 // pred_check
          %p542 = pneg %p53
        $region82: #{tpu_custom_call.1} parent=79 // pred_check_branch
          %544 = sbr.rel (%p542) target = $region84
        $region83: #{tpu_custom_call.1} parent=79 // pred_region
          %s545 = sand.u32 %s43, 1
          %s546 = scalar_lea.sflag [#allocation4], %s545
          %s547 = sand.u32 %s43, 1
          %s548 = smul.addr %s547, 8
          %s549 = scalar_lea.vmem [#allocation3], %s548
          %s551 = ssub.s32 128, 128
          %552 = vsyncadd %s546, %s551
          %s553 = smul.addr %s33, 128
          %s554 = scalar_lea.hbm %s0, %s553
          %s556 = sshll.u32 %s549, 4
          %s557 = int_to_ptr.vmem [resolvable:$true] %s556
          %559 = dma.hbm_to_vmem [thread:$0]  %s554, 128, %s557, %s546
        $region84: #{tpu_custom_call.1} parent=79 // pred_fallthru
          _
      $region80: #{tpu_custom_call.1} parent=5 // pred_fallthru
        _
      %p560 = scmp.le.s32.totalorder 1, %s33
      %p561 = scmp.lt.s32.totalorder %s33, 3
      %p562 = pnand %p560, %p561
      %p563 = pneg %p562
      // Predicated region
      $region85: #{tpu_custom_call.1} parent=5 // pred_check
        _
      $region86: #{tpu_custom_call.1} parent=5 // pred_check_branch
        %565 = sbr.rel (%p562) target = $region88
      $region87: #{tpu_custom_call.1} parent=5 // pred_region
        %s566 = ssub.s32 %s33, 1
        %s567 = sand.u32 %s46, 1
        %s568 = scalar_lea.sflag [#allocation4], %s567
        %s569 = sand.u32 %s46, 1
        %s570 = smul.addr %s569, 8
        %s571 = scalar_lea.vmem [#allocation3], %s570
        // Predicated region
        $region89: #{tpu_custom_call.1} parent=87 // pred_check
          %p572 = pneg %p59
        $region90: #{tpu_custom_call.1} parent=87 // pred_check_branch
          %574 = sbr.rel (%p572) target = $region92
        $region91: #{tpu_custom_call.1} parent=87 // pred_region
          %575 = dma.done %s568, 128
        $region92: #{tpu_custom_call.1} parent=87 // pred_fallthru
          _
        // Predicated region
        $region93: #{tpu_custom_call.1} parent=87 // pred_check
          %p576 = pneg %p80
        $region94: #{tpu_custom_call.1} parent=87 // pred_check_branch
          %578 = sbr.rel (%p576) target = $region96
        $region95: #{tpu_custom_call.1} parent=87 // pred_region
          %579 = dma.done [#allocation7], 128
        $region96: #{tpu_custom_call.1} parent=87 // pred_fallthru
          _
        // Predicated region
        $region97: #{tpu_custom_call.1} parent=87 // pred_check
          %p580 = pneg %p122
        $region98: #{tpu_custom_call.1} parent=87 // pred_check_branch
          %582 = sbr.rel (%p580) target = $region100
        $region99: #{tpu_custom_call.1} parent=87 // pred_region
          %583 = dma.done [#allocation7], 128
        $region100: #{tpu_custom_call.1} parent=87 // pred_fallthru
          _
        // Predicated region
        $region101: #{tpu_custom_call.1} parent=87 // pred_check
          %p584 = pneg %p143
        $region102: #{tpu_custom_call.1} parent=87 // pred_check_branch
          %586 = sbr.rel (%p584) target = $region104
        $region103: #{tpu_custom_call.1} parent=87 // pred_region
          %587 = dma.done [#allocation10], 128
        $region104: #{tpu_custom_call.1} parent=87 // pred_fallthru
          _
        // Predicated region
        $region105: #{tpu_custom_call.1} parent=87 // pred_check
          %p588 = pneg %p164
        $region106: #{tpu_custom_call.1} parent=87 // pred_check_branch
          %590 = sbr.rel (%p588) target = $region108
        $region107: #{tpu_custom_call.1} parent=87 // pred_region
          %591 = dma.done [#allocation10], 2048
        $region108: #{tpu_custom_call.1} parent=87 // pred_fallthru
          _
        // Predicated region
        $region109: #{tpu_custom_call.1} parent=87 // pred_check
          %p592 = pneg %p311
        $region110: #{tpu_custom_call.1} parent=87 // pred_check_branch
          %594 = sbr.rel (%p592) target = $region112
        $region111: #{tpu_custom_call.1} parent=87 // pred_region
          %595 = dma.done [#allocation13], 512
        $region112: #{tpu_custom_call.1} parent=87 // pred_fallthru
          _
        // Predicated region
        $region113: #{tpu_custom_call.1} parent=87 // pred_check
          %p596 = pneg %p374
        $region114: #{tpu_custom_call.1} parent=87 // pred_check_branch
          %598 = sbr.rel (%p596) target = $region116
        $region115: #{tpu_custom_call.1} parent=87 // pred_region
          %599 = dma.done [#allocation13], 512
        $region116: #{tpu_custom_call.1} parent=87 // pred_fallthru
          _
        %s600 = sand.u32 %s46, 1
        %s601 = scalar_lea.sflag [#allocation4], %s600
        %s602 = sand.u32 %s46, 1
        %s603 = smul.addr %s602, 8
        %s604 = scalar_lea.vmem [#allocation3], %s603
        %p605 = pneg %p59
        %p606 = pneg %p56
        %p607 = pneg %p80
        %p608 = pneg %p77
        %p609 = pneg %p101
        %p610 = pneg %p98
        %p611 = pneg %p122
        %p612 = pneg %p119
        %p613 = pneg %p143
        %p614 = pneg %p140
        %p615 = pneg %p164
        %p616 = pneg %p161
        %p617 = pneg %p185
        %p618 = pneg %p182
        %p619 = pneg %p206
        %p620 = pneg %p203
        %p621 = pneg %p227
        %p622 = pneg %p224
        %p623 = pneg %p248
        %p624 = pneg %p245
        %p625 = pneg %p269
        %p626 = pneg %p266
        %p627 = pneg %p290
        %p628 = pneg %p287
        %p629 = pneg %p311
        %p630 = pneg %p308
        %p631 = pneg %p332
        %p632 = pneg %p329
        %p633 = pneg %p353
        %p634 = pneg %p350
        %p635 = pneg %p374
        %p636 = pneg %p371
        %p637 = pneg %p395
        %p638 = pneg %p392
        %p639 = pneg %p421
        %p640 = pneg %p418
        %s641 = sand.u32 %s408, 1
        %s642 = scalar_lea.sflag [#allocation5], %s641
        %s643 = sand.u32 %s408, 1
        %s644 = smul.addr %s643, 8
        %s645 = scalar_lea.vmem [#allocation15], %s644
        %v646 = vld [vmem:[%s571] sm:$0xff]
        %v647 = vld [vmem:[#allocation6] sm:$0xff]
        %v648 = vmul.f32 %v646, %v646
        %vm649 = vcmask 261120
        %v650 = vsel %vm649, %v648, 0.0
        %651 = vadd.xlane.f32.xlu0 %v650
        %v652 = vpop.xlane.xlu0 %651
        %v653 = vrot.slane %v652, 4
        %v654 = vadd.f32 %v652, %v653
        %v655 = vrot.slane %v654, 2
        %v656 = vadd.f32 %v654, %v655
        %v657 = vrot.slane %v656, 1
        %v658 = vadd.f32 %v656, %v657
        %s659 = vtos %v658
        %s660 = smul.f32 %s659, 0.00390625
        %v661 = vmul.f32 %v647, %v646
        %v662 = vstv %s660
        %v663 = vrsqrt.pop %v662
        %s664 = vtos %v663
        %v665 = vstv %s664
        %v666 = vmul.f32 %v661, %v665
        %v667 = vld [vmem:[%s2] sm:$0xff]
        %v668 = vld [vmem:[%s2 + $0x8] sm:$0xff]
        %v669 = vld [vmem:[%s2 + $0x10] sm:$0xff]
        %v670 = vld [vmem:[%s2 + $0x18] sm:$0xff]
        %v671 = vld [vmem:[%s2 + $0x20] sm:$0xff]
        %v672 = vld [vmem:[%s2 + $0x28] sm:$0xff]
        %v673 = vld [vmem:[%s2 + $0x30] sm:$0xff]
        %v674 = vld [vmem:[%s2 + $0x38] sm:$0xff]
        %v676 = vsel %vm649, %v666, 0
        %678 = vmatprep.subr.mxu0 %v668
        %679 = vmatpush1.msra.mxu0 %v667
        %680 = vmatprep.subr.mxu0 %v670
        %681 = vmatpush1.msra.mxu0 %v669
        %682 = vmatprep.subr.mxu0 %v672
        %683 = vmatpush1.msra.mxu0 %v671
        %684 = vmatprep.subr.mxu0 %v674
        %685 = vmatpush1.msra.mxu0 %v673
        %686 = vmatprep.subr.mxu0 0.0
        %687 = vmatpush1.msra.mxu0 0.0
        %688 = vmatprep.subr.mxu0 0.0
        %689 = vmatpush1.msra.mxu0 0.0
        %690 = vmatprep.subr.mxu0 0.0
        %691 = vmatpush1.msra.mxu0 0.0
        %692 = vmatprep.subr.mxu0 0.0
        %693 = vmatpush1.msra.mxu0 0.0
        %694 = vmatprep.subr.mxu0 0.0
        %695 = vmatpush1.msra.mxu0 0.0
        %696 = vmatprep.subr.mxu0 0.0
        %697 = vmatpush1.msra.mxu0 0.0
        %698 = vmatprep.subr.mxu0 0.0
        %699 = vmatpush1.msra.mxu0 0.0
        %700 = vmatprep.subr.mxu0 0.0
        %701 = vmatpush1.msra.mxu0 0.0
        %702 = vmatprep.subr.mxu0 0.0
        %703 = vmatpush1.msra.mxu0 0.0
        %704 = vmatprep.subr.mxu0 0.0
        %705 = vmatpush1.msra.mxu0 0.0
        %706 = vmatprep.subr.mxu0 0.0
        %707 = vmatpush1.msra.mxu0 0.0
        %708 = vmatprep.subr.mxu0 0.0
        %709 = vmatpush1.msra.mxu0 0.0
        %710 = vmatprep.subr.mxu0 0.0
        %711 = vmatpush1.msra.mxu0 0.0
        %712 = vmatprep.subr.mxu0 0.0
        %713 = vmatpush1.msra.mxu0 0.0
        %714 = vmatprep.subr.mxu0 0.0
        %715 = vmatpush1.msra.mxu0 0.0
        %716 = vmatprep.subr.mxu0 0.0
        %717 = vmatpush1.msra.mxu0 0.0
        %718 = vmatprep.subr.mxu0 0.0
        %719 = vmatpush1.msra.mxu0 0.0
        %720 = vmatprep.subr.mxu0 0.0
        %721 = vmatpush1.msra.mxu0 0.0
        %722 = vmatprep.subr.mxu0 0.0
        %723 = vmatpush1.msra.mxu0 0.0
        %724 = vmatprep.subr.mxu0 0.0
        %725 = vmatpush1.msra.mxu0 0.0
        %726 = vmatprep.subr.mxu0 0.0
        %727 = vmatpush1.msra.mxu0 0.0
        %728 = vmatprep.subr.mxu0 0.0
        %729 = vmatpush1.msra.mxu0 0.0
        %730 = vmatprep.subr.mxu0 0.0
        %731 = vmatpush1.msra.mxu0 0.0
        %732 = vmatprep.subr.mxu0 0.0
        %733 = vmatpush1.msra.mxu0 0.0
        %734 = vmatprep.subr.mxu0 0.0
        %735 = vmatpush1.msra.mxu0 0.0
        %736 = vmatprep.subr.mxu0 0.0
        %737 = vmatpush1.msra.mxu0 0.0
        %738 = vmatprep.subr.mxu0 0.0
        %739 = vmatpush1.msra.mxu0 0.0
        %740 = vmatprep.subr.mxu0 0.0
        %741 = vmatpush1.msra.mxu0 0.0
        %742 = vmatprep.mubr.f32.mxu0 0.0
        %743 = vmatmul.mubr.f32.gmra.mrb[0].mxu0 %v676
        %v744 = vpop.f32.mrb[0].mxu0
        %v745 = vadd.f32 0.0, %v744
        %v746 = vpop.f32.mrb[0].mxu0
        %v747 = vadd.f32 0.0, %v746
        %748 = vdwg.mxu0
        %v749 = vld [vmem:[#allocation8] sm:$0xff]
        %v750 = vmul.f32 %v749, %v745
        %v751 = vld [vmem:[#allocation9] sm:$0xff]
        %v752 = vmul.f32 %v751, %v745
        %v753 = vld [vmem:[#allocation11] sm:$0xff]
        %v754 = vld [vmem:[#allocation11 + $0x8] sm:$0xff]
        %v755 = vld [vmem:[#allocation11 + $0x10] sm:$0xff]
        %v756 = vld [vmem:[#allocation11 + $0x18] sm:$0xff]
        %v757 = vld [vmem:[#allocation11 + $0x20] sm:$0xff]
        %v758 = vld [vmem:[#allocation11 + $0x28] sm:$0xff]
        %v759 = vld [vmem:[#allocation11 + $0x30] sm:$0xff]
        %v760 = vld [vmem:[#allocation11 + $0x38] sm:$0xff]
        %v761 = vld [vmem:[#allocation11 + $0x40] sm:$0xff]
        %v762 = vld [vmem:[#allocation11 + $0x48] sm:$0xff]
        %v763 = vld [vmem:[#allocation11 + $0x50] sm:$0xff]
        %v764 = vld [vmem:[#allocation11 + $0x58] sm:$0xff]
        %v765 = vld [vmem:[#allocation11 + $0x60] sm:$0xff]
        %v766 = vld [vmem:[#allocation11 + $0x68] sm:$0xff]
        %v767 = vld [vmem:[#allocation11 + $0x70] sm:$0xff]
        %v768 = vld [vmem:[#allocation11 + $0x78] sm:$0xff]
        %769 = vmatprep.subr.mxu0 0.0
        %770 = vmatpush1.msra.mxu0 %v753
        %771 = vmatprep.subr.mxu0 0.0
        %772 = vmatpush1.msra.mxu0 %v754
        %773 = vmatprep.subr.mxu0 0.0
        %774 = vmatpush1.msra.mxu0 %v755
        %775 = vmatprep.subr.mxu0 0.0
        %776 = vmatpush1.msra.mxu0 %v756
        %777 = vmatprep.subr.mxu0 0.0
        %778 = vmatpush1.msra.mxu0 %v757
        %779 = vmatprep.subr.mxu0 0.0
        %780 = vmatpush1.msra.mxu0 %v758
        %781 = vmatprep.subr.mxu0 0.0
        %782 = vmatpush1.msra.mxu0 %v759
        %783 = vmatprep.subr.mxu0 0.0
        %784 = vmatpush1.msra.mxu0 %v760
        %785 = vmatprep.subr.mxu0 0.0
        %786 = vmatpush1.msra.mxu0 %v761
        %787 = vmatprep.subr.mxu0 0.0
        %788 = vmatpush1.msra.mxu0 %v762
        %789 = vmatprep.subr.mxu0 0.0
        %790 = vmatpush1.msra.mxu0 %v763
        %791 = vmatprep.subr.mxu0 0.0
        %792 = vmatpush1.msra.mxu0 %v764
        %793 = vmatprep.subr.mxu0 0.0
        %794 = vmatpush1.msra.mxu0 %v765
        %795 = vmatprep.subr.mxu0 0.0
        %796 = vmatpush1.msra.mxu0 %v766
        %797 = vmatprep.subr.mxu0 0.0
        %798 = vmatpush1.msra.mxu0 %v767
        %799 = vmatprep.subr.mxu0 0.0
        %800 = vmatpush1.msra.mxu0 %v768
        %801 = vmatprep.subr.mxu0 0.0
        %802 = vmatpush1.msra.mxu0 0.0
        %803 = vmatprep.subr.mxu0 0.0
        %804 = vmatpush1.msra.mxu0 0.0
        %805 = vmatprep.subr.mxu0 0.0
        %806 = vmatpush1.msra.mxu0 0.0
        %807 = vmatprep.subr.mxu0 0.0
        %808 = vmatpush1.msra.mxu0 0.0
        %809 = vmatprep.subr.mxu0 0.0
        %810 = vmatpush1.msra.mxu0 0.0
        %811 = vmatprep.subr.mxu0 0.0
        %812 = vmatpush1.msra.mxu0 0.0
        %813 = vmatprep.subr.mxu0 0.0
        %814 = vmatpush1.msra.mxu0 0.0
        %815 = vmatprep.subr.mxu0 0.0
        %816 = vmatpush1.msra.mxu0 0.0
        %817 = vmatprep.subr.mxu0 0.0
        %818 = vmatpush1.msra.mxu0 0.0
        %819 = vmatprep.subr.mxu0 0.0
        %820 = vmatpush1.msra.mxu0 0.0
        %821 = vmatprep.subr.mxu0 0.0
        %822 = vmatpush1.msra.mxu0 0.0
        %823 = vmatprep.subr.mxu0 0.0
        %824 = vmatpush1.msra.mxu0 0.0
        %825 = vmatprep.subr.mxu0 0.0
        %826 = vmatpush1.msra.mxu0 0.0
        %827 = vmatprep.subr.mxu0 0.0
        %828 = vmatpush1.msra.mxu0 0.0
        %829 = vmatprep.subr.mxu0 0.0
        %830 = vmatpush1.msra.mxu0 0.0
        %831 = vmatprep.subr.mxu0 0.0
        %832 = vmatpush1.msra.mxu0 0.0
        %833 = vmatprep.mubr.f32.mxu0 0.0
        %834 = vmatmul.mubr.f32.gmra.mrb[0].mxu0 %v752
        %v835 = vpop.f32.mrb[0].mxu0
        %v836 = vadd.f32 0.0, %v835
        %v837 = vpop.f32.mrb[0].mxu0
        %838 = vdwg.mxu0
        %v839 = vadd.f32 %v750, %v836
        %v840 = vlaneseq
        %v841 = vshrl.u32 %v840, 7
        %v842 = vlaneseq
        %v843 = vand.u32 %v842, 127
        %vm844 = vcmp.le.s32.totalorder %v843, %v841
        %846 = vrot.lane.b32.xlu0 %v839, 64
        %v847 = vpop.permute.xlu0 %846
        %v848 = vsel %vm649, %v839, 0
        %v850 = vsel %vm649, %v847, 0
        %852 = vmatprep.subr.mxu0 0.0
        %853 = vmatpush1.xpose.msra.mxu0 %v850
        %854 = vmatprep.subr.mxu0 0.0
        %855 = vmatpush1.xpose.msra.mxu0 0.0
        %856 = vmatprep.subr.mxu0 0.0
        %857 = vmatpush1.xpose.msra.mxu0 0.0
        %858 = vmatprep.subr.mxu0 0.0
        %859 = vmatpush1.xpose.msra.mxu0 0.0
        %860 = vmatprep.subr.mxu0 0.0
        %861 = vmatpush1.xpose.msra.mxu0 0.0
        %862 = vmatprep.subr.mxu0 0.0
        %863 = vmatpush1.xpose.msra.mxu0 0.0
        %864 = vmatprep.subr.mxu0 0.0
        %865 = vmatpush1.xpose.msra.mxu0 0.0
        %866 = vmatprep.subr.mxu0 0.0
        %867 = vmatpush1.xpose.msra.mxu0 0.0
        %868 = vmatprep.subr.mxu0 0.0
        %869 = vmatpush1.xpose.msra.mxu0 0.0
        %870 = vmatprep.subr.mxu0 0.0
        %871 = vmatpush1.xpose.msra.mxu0 0.0
        %872 = vmatprep.subr.mxu0 0.0
        %873 = vmatpush1.xpose.msra.mxu0 0.0
        %874 = vmatprep.subr.mxu0 0.0
        %875 = vmatpush1.xpose.msra.mxu0 0.0
        %876 = vmatprep.subr.mxu0 0.0
        %877 = vmatpush1.xpose.msra.mxu0 0.0
        %878 = vmatprep.subr.mxu0 0.0
        %879 = vmatpush1.xpose.msra.mxu0 0.0
        %880 = vmatprep.subr.mxu0 0.0
        %881 = vmatpush1.xpose.msra.mxu0 0.0
        %882 = vmatprep.subr.mxu0 0.0
        %883 = vmatpush1.xpose.msra.mxu0 0.0
        %884 = vmatprep.subr.mxu0 0.0
        %885 = vmatpush1.xpose.msra.mxu0 0.0
        %886 = vmatprep.subr.mxu0 0.0
        %887 = vmatpush1.xpose.msra.mxu0 0.0
        %888 = vmatprep.subr.mxu0 0.0
        %889 = vmatpush1.xpose.msra.mxu0 0.0
        %890 = vmatprep.subr.mxu0 0.0
        %891 = vmatpush1.xpose.msra.mxu0 0.0
        %892 = vmatprep.subr.mxu0 0.0
        %893 = vmatpush1.xpose.msra.mxu0 0.0
        %894 = vmatprep.subr.mxu0 0.0
        %895 = vmatpush1.xpose.msra.mxu0 0.0
        %896 = vmatprep.subr.mxu0 0.0
        %897 = vmatpush1.xpose.msra.mxu0 0.0
        %898 = vmatprep.subr.mxu0 0.0
        %899 = vmatpush1.xpose.msra.mxu0 0.0
        %900 = vmatprep.subr.mxu0 0.0
        %901 = vmatpush1.xpose.msra.mxu0 0.0
        %902 = vmatprep.subr.mxu0 0.0
        %903 = vmatpush1.xpose.msra.mxu0 0.0
        %904 = vmatprep.subr.mxu0 0.0
        %905 = vmatpush1.xpose.msra.mxu0 0.0
        %906 = vmatprep.subr.mxu0 0.0
        %907 = vmatpush1.xpose.msra.mxu0 0.0
        %908 = vmatprep.subr.mxu0 0.0
        %909 = vmatpush1.xpose.msra.mxu0 0.0
        %910 = vmatprep.subr.mxu0 0.0
        %911 = vmatpush1.xpose.msra.mxu0 0.0
        %912 = vmatprep.subr.mxu0 0.0
        %913 = vmatpush1.xpose.msra.mxu0 0.0
        %914 = vmatprep.subr.mxu0 0.0
        %915 = vmatpush1.xpose.msra.mxu0 0.0
        %916 = vmatprep.mubr.f32.mxu0 0.0
        %917 = vmatmul.mubr.f32.gmra.mrb[0].mxu0 %v848
        %v918 = vpop.f32.mrb[0].mxu0
        %v919 = vadd.f32 0.0, %v918
        %v920 = vpop.f32.mrb[0].mxu0
        %921 = vdwg.mxu0
        %v922 = vmul.f32 %v919, 0.17677669
        %v923 = vsel %vm844, %v922, -1e+30
        %vm924 = vcmask 64512
        %v925 = vsel %vm924, %v923, -inf
        %926 = vmax.xlane.f32.xlu0 %v925
        %v927 = vpop.xlane.xlu0 %926
        %v928 = vsub.f32 %v923, %v927
        %v929 = vmul.f32 %v928, 1.442695
        %v930 = vpow.pop %v929
        %v931 = vsel %vm924, %v930, 0.0
        %932 = vadd.xlane.f32.xlu0 %v931
        %v933 = vpop.xlane.xlu0 %932
        %v934 = vrcp.pop %v933
        %v935 = vmul.f32 %v930, %v934
        %v937 = vsel %vm924, %v935, 0
        %939 = vmatprep.subr.mxu0 0.0
        %940 = vmatpush1.msra.mxu0 %v747
        %941 = vmatprep.subr.mxu0 0.0
        %942 = vmatpush1.msra.mxu0 0.0
        %943 = vmatprep.subr.mxu0 0.0
        %944 = vmatpush1.msra.mxu0 0.0
        %945 = vmatprep.subr.mxu0 0.0
        %946 = vmatpush1.msra.mxu0 0.0
        %947 = vmatprep.subr.mxu0 0.0
        %948 = vmatpush1.msra.mxu0 0.0
        %949 = vmatprep.subr.mxu0 0.0
        %950 = vmatpush1.msra.mxu0 0.0
        %951 = vmatprep.subr.mxu0 0.0
        %952 = vmatpush1.msra.mxu0 0.0
        %953 = vmatprep.subr.mxu0 0.0
        %954 = vmatpush1.msra.mxu0 0.0
        %955 = vmatprep.subr.mxu0 0.0
        %956 = vmatpush1.msra.mxu0 0.0
        %957 = vmatprep.subr.mxu0 0.0
        %958 = vmatpush1.msra.mxu0 0.0
        %959 = vmatprep.subr.mxu0 0.0
        %960 = vmatpush1.msra.mxu0 0.0
        %961 = vmatprep.subr.mxu0 0.0
        %962 = vmatpush1.msra.mxu0 0.0
        %963 = vmatprep.subr.mxu0 0.0
        %964 = vmatpush1.msra.mxu0 0.0
        %965 = vmatprep.subr.mxu0 0.0
        %966 = vmatpush1.msra.mxu0 0.0
        %967 = vmatprep.subr.mxu0 0.0
        %968 = vmatpush1.msra.mxu0 0.0
        %969 = vmatprep.subr.mxu0 0.0
        %970 = vmatpush1.msra.mxu0 0.0
        %971 = vmatprep.subr.mxu0 0.0
        %972 = vmatpush1.msra.mxu0 0.0
        %973 = vmatprep.subr.mxu0 0.0
        %974 = vmatpush1.msra.mxu0 0.0
        %975 = vmatprep.subr.mxu0 0.0
        %976 = vmatpush1.msra.mxu0 0.0
        %977 = vmatprep.subr.mxu0 0.0
        %978 = vmatpush1.msra.mxu0 0.0
        %979 = vmatprep.subr.mxu0 0.0
        %980 = vmatpush1.msra.mxu0 0.0
        %981 = vmatprep.subr.mxu0 0.0
        %982 = vmatpush1.msra.mxu0 0.0
        %983 = vmatprep.subr.mxu0 0.0
        %984 = vmatpush1.msra.mxu0 0.0
        %985 = vmatprep.subr.mxu0 0.0
        %986 = vmatpush1.msra.mxu0 0.0
        %987 = vmatprep.subr.mxu0 0.0
        %988 = vmatpush1.msra.mxu0 0.0
        %989 = vmatprep.subr.mxu0 0.0
        %990 = vmatpush1.msra.mxu0 0.0
        %991 = vmatprep.subr.mxu0 0.0
        %992 = vmatpush1.msra.mxu0 0.0
        %993 = vmatprep.subr.mxu0 0.0
        %994 = vmatpush1.msra.mxu0 0.0
        %995 = vmatprep.subr.mxu0 0.0
        %996 = vmatpush1.msra.mxu0 0.0
        %997 = vmatprep.subr.mxu0 0.0
        %998 = vmatpush1.msra.mxu0 0.0
        %999 = vmatprep.subr.mxu0 0.0
        %1000 = vmatpush1.msra.mxu0 0.0
        %1001 = vmatprep.subr.mxu0 0.0
        %1002 = vmatpush1.msra.mxu0 0.0
        %1003 = vmatprep.mubr.f32.mxu0 0.0
        %1004 = vmatmul.mubr.f32.gmra.mrb[0].mxu0 %v937
        %v1005 = vpop.f32.mrb[0].mxu0
        %v1006 = vadd.f32 0.0, %v1005
        %v1007 = vpop.f32.mrb[0].mxu0
        %1008 = vdwg.mxu0
        %1009 = vrot.lane.b32.xlu0 %v839, 96
        %v1010 = vpop.permute.xlu0 %1009
        %1011 = vrot.lane.b32.xlu0 %v839, 32
        %v1012 = vpop.permute.xlu0 %1011
        %v1013 = vsel %vm649, %v1010, 0
        %v1015 = vsel %vm649, %v1012, 0
        %1017 = vmatprep.subr.mxu0 0.0
        %1018 = vmatpush1.xpose.msra.mxu0 %v1015
        %1019 = vmatprep.subr.mxu0 0.0
        %1020 = vmatpush1.xpose.msra.mxu0 0.0
        %1021 = vmatprep.subr.mxu0 0.0
        %1022 = vmatpush1.xpose.msra.mxu0 0.0
        %1023 = vmatprep.subr.mxu0 0.0
        %1024 = vmatpush1.xpose.msra.mxu0 0.0
        %1025 = vmatprep.subr.mxu0 0.0
        %1026 = vmatpush1.xpose.msra.mxu0 0.0
        %1027 = vmatprep.subr.mxu0 0.0
        %1028 = vmatpush1.xpose.msra.mxu0 0.0
        %1029 = vmatprep.subr.mxu0 0.0
        %1030 = vmatpush1.xpose.msra.mxu0 0.0
        %1031 = vmatprep.subr.mxu0 0.0
        %1032 = vmatpush1.xpose.msra.mxu0 0.0
        %1033 = vmatprep.subr.mxu0 0.0
        %1034 = vmatpush1.xpose.msra.mxu0 0.0
        %1035 = vmatprep.subr.mxu0 0.0
        %1036 = vmatpush1.xpose.msra.mxu0 0.0
        %1037 = vmatprep.subr.mxu0 0.0
        %1038 = vmatpush1.xpose.msra.mxu0 0.0
        %1039 = vmatprep.subr.mxu0 0.0
        %1040 = vmatpush1.xpose.msra.mxu0 0.0
        %1041 = vmatprep.subr.mxu0 0.0
        %1042 = vmatpush1.xpose.msra.mxu0 0.0
        %1043 = vmatprep.subr.mxu0 0.0
        %1044 = vmatpush1.xpose.msra.mxu0 0.0
        %1045 = vmatprep.subr.mxu0 0.0
        %1046 = vmatpush1.xpose.msra.mxu0 0.0
        %1047 = vmatprep.subr.mxu0 0.0
        %1048 = vmatpush1.xpose.msra.mxu0 0.0
        %1049 = vmatprep.subr.mxu0 0.0
        %1050 = vmatpush1.xpose.msra.mxu0 0.0
        %1051 = vmatprep.subr.mxu0 0.0
        %1052 = vmatpush1.xpose.msra.mxu0 0.0
        %1053 = vmatprep.subr.mxu0 0.0
        %1054 = vmatpush1.xpose.msra.mxu0 0.0
        %1055 = vmatprep.subr.mxu0 0.0
        %1056 = vmatpush1.xpose.msra.mxu0 0.0
        %1057 = vmatprep.subr.mxu0 0.0
        %1058 = vmatpush1.xpose.msra.mxu0 0.0
        %1059 = vmatprep.subr.mxu0 0.0
        %1060 = vmatpush1.xpose.msra.mxu0 0.0
        %1061 = vmatprep.subr.mxu0 0.0
        %1062 = vmatpush1.xpose.msra.mxu0 0.0
        %1063 = vmatprep.subr.mxu0 0.0
        %1064 = vmatpush1.xpose.msra.mxu0 0.0
        %1065 = vmatprep.subr.mxu0 0.0
        %1066 = vmatpush1.xpose.msra.mxu0 0.0
        %1067 = vmatprep.subr.mxu0 0.0
        %1068 = vmatpush1.xpose.msra.mxu0 0.0
        %1069 = vmatprep.subr.mxu0 0.0
        %1070 = vmatpush1.xpose.msra.mxu0 0.0
        %1071 = vmatprep.subr.mxu0 0.0
        %1072 = vmatpush1.xpose.msra.mxu0 0.0
        %1073 = vmatprep.subr.mxu0 0.0
        %1074 = vmatpush1.xpose.msra.mxu0 0.0
        %1075 = vmatprep.subr.mxu0 0.0
        %1076 = vmatpush1.xpose.msra.mxu0 0.0
        %1077 = vmatprep.subr.mxu0 0.0
        %1078 = vmatpush1.xpose.msra.mxu0 0.0
        %1079 = vmatprep.subr.mxu0 0.0
        %1080 = vmatpush1.xpose.msra.mxu0 0.0
        %1081 = vmatprep.mubr.f32.mxu0 0.0
        %1082 = vmatmul.mubr.f32.gmra.mrb[0].mxu0 %v1013
        %v1083 = vpop.f32.mrb[0].mxu0
        %v1084 = vadd.f32 0.0, %v1083
        %v1085 = vpop.f32.mrb[0].mxu0
        %1086 = vdwg.mxu0
        %v1087 = vmul.f32 %v1084, 0.17677669
        %v1088 = vsel %vm844, %v1087, -1e+30
        %v1089 = vsel %vm924, %v1088, -inf
        %1090 = vmax.xlane.f32.xlu0 %v1089
        %v1091 = vpop.xlane.xlu0 %1090
        %v1092 = vsub.f32 %v1088, %v1091
        %v1093 = vmul.f32 %v1092, 1.442695
        %v1094 = vpow.pop %v1093
        %v1095 = vsel %vm924, %v1094, 0.0
        %1096 = vadd.xlane.f32.xlu0 %v1095
        %v1097 = vpop.xlane.xlu0 %1096
        %v1098 = vrcp.pop %v1097
        %v1099 = vmul.f32 %v1094, %v1098
        %1101 = vrot.lane.b32.xlu0 %v747, 96
        %v1102 = vpop.permute.xlu0 %1101
        %v1105 = vsel %vm924, %v1099, 0
        %1107 = vmatprep.subr.mxu0 0.0
        %1108 = vmatpush1.msra.mxu0 %v1102
        %1109 = vmatprep.subr.mxu0 0.0
        %1110 = vmatpush1.msra.mxu0 0.0
        %1111 = vmatprep.subr.mxu0 0.0
        %1112 = vmatpush1.msra.mxu0 0.0
        %1113 = vmatprep.subr.mxu0 0.0
        %1114 = vmatpush1.msra.mxu0 0.0
        %1115 = vmatprep.subr.mxu0 0.0
        %1116 = vmatpush1.msra.mxu0 0.0
        %1117 = vmatprep.subr.mxu0 0.0
        %1118 = vmatpush1.msra.mxu0 0.0
        %1119 = vmatprep.subr.mxu0 0.0
        %1120 = vmatpush1.msra.mxu0 0.0
        %1121 = vmatprep.subr.mxu0 0.0
        %1122 = vmatpush1.msra.mxu0 0.0
        %1123 = vmatprep.subr.mxu0 0.0
        %1124 = vmatpush1.msra.mxu0 0.0
        %1125 = vmatprep.subr.mxu0 0.0
        %1126 = vmatpush1.msra.mxu0 0.0
        %1127 = vmatprep.subr.mxu0 0.0
        %1128 = vmatpush1.msra.mxu0 0.0
        %1129 = vmatprep.subr.mxu0 0.0
        %1130 = vmatpush1.msra.mxu0 0.0
        %1131 = vmatprep.subr.mxu0 0.0
        %1132 = vmatpush1.msra.mxu0 0.0
        %1133 = vmatprep.subr.mxu0 0.0
        %1134 = vmatpush1.msra.mxu0 0.0
        %1135 = vmatprep.subr.mxu0 0.0
        %1136 = vmatpush1.msra.mxu0 0.0
        %1137 = vmatprep.subr.mxu0 0.0
        %1138 = vmatpush1.msra.mxu0 0.0
        %1139 = vmatprep.subr.mxu0 0.0
        %1140 = vmatpush1.msra.mxu0 0.0
        %1141 = vmatprep.subr.mxu0 0.0
        %1142 = vmatpush1.msra.mxu0 0.0
        %1143 = vmatprep.subr.mxu0 0.0
        %1144 = vmatpush1.msra.mxu0 0.0
        %1145 = vmatprep.subr.mxu0 0.0
        %1146 = vmatpush1.msra.mxu0 0.0
        %1147 = vmatprep.subr.mxu0 0.0
        %1148 = vmatpush1.msra.mxu0 0.0
        %1149 = vmatprep.subr.mxu0 0.0
        %1150 = vmatpush1.msra.mxu0 0.0
        %1151 = vmatprep.subr.mxu0 0.0
        %1152 = vmatpush1.msra.mxu0 0.0
        %1153 = vmatprep.subr.mxu0 0.0
        %1154 = vmatpush1.msra.mxu0 0.0
        %1155 = vmatprep.subr.mxu0 0.0
        %1156 = vmatpush1.msra.mxu0 0.0
        %1157 = vmatprep.subr.mxu0 0.0
        %1158 = vmatpush1.msra.mxu0 0.0
        %1159 = vmatprep.subr.mxu0 0.0
        %1160 = vmatpush1.msra.mxu0 0.0
        %1161 = vmatprep.subr.mxu0 0.0
        %1162 = vmatpush1.msra.mxu0 0.0
        %1163 = vmatprep.subr.mxu0 0.0
        %1164 = vmatpush1.msra.mxu0 0.0
        %1165 = vmatprep.subr.mxu0 0.0
        %1166 = vmatpush1.msra.mxu0 0.0
        %1167 = vmatprep.subr.mxu0 0.0
        %1168 = vmatpush1.msra.mxu0 0.0
        %1169 = vmatprep.subr.mxu0 0.0
        %1170 = vmatpush1.msra.mxu0 0.0
        %1171 = vmatprep.mubr.f32.mxu0 0.0
        %1172 = vmatmul.mubr.f32.gmra.mrb[0].mxu0 %v1105
        %v1173 = vpop.f32.mrb[0].mxu0
        %v1174 = vadd.f32 0.0, %v1173
        %v1175 = vpop.f32.mrb[0].mxu0
        %1176 = vdwg.mxu0
        %1178 = vrot.lane.b32.xlu0 %v1174, 32
        %v1179 = vpop.permute.xlu0 %1178
        %v1181 = vsel %vm649, %v1006, %v1179
        %v1182 = vld [vmem:[%s6] sm:$0xff]
        %v1183 = vld [vmem:[%s6 + $0x8] sm:$0xff]
        %v1184 = vld [vmem:[%s6 + $0x10] sm:$0xff]
        %v1185 = vld [vmem:[%s6 + $0x18] sm:$0xff]
        %v1186 = vld [vmem:[%s6 + $0x20] sm:$0xff]
        %v1187 = vld [vmem:[%s6 + $0x28] sm:$0xff]
        %v1188 = vld [vmem:[%s6 + $0x30] sm:$0xff]
        %v1189 = vld [vmem:[%s6 + $0x38] sm:$0xff]
        %v1190 = vld [vmem:[%s7] sm:$0x1]
        %v1192 = vlaneseq
        %v1193 = vshrl.u32 %v1192, 7
        %v1194 = vsub.s32 0, %v1193
        %v1195 = vrot.slane %v1190, %v1194
        %vm1197 = vcmask 523264
        %v1199 = vsel %vm1197, %v1181, 0
        %1201 = vmatprep.subr.mxu0 0.0
        %1202 = vmatpush1.msra.mxu0 %v1182
        %1203 = vmatprep.subr.mxu0 0.0
        %1204 = vmatpush1.msra.mxu0 %v1183
        %1205 = vmatprep.subr.mxu0 0.0
        %1206 = vmatpush1.msra.mxu0 %v1184
        %1207 = vmatprep.subr.mxu0 0.0
        %1208 = vmatpush1.msra.mxu0 %v1185
        %1209 = vmatprep.subr.mxu0 0.0
        %1210 = vmatpush1.msra.mxu0 %v1186
        %1211 = vmatprep.subr.mxu0 0.0
        %1212 = vmatpush1.msra.mxu0 %v1187
        %1213 = vmatprep.subr.mxu0 0.0
        %1214 = vmatpush1.msra.mxu0 %v1188
        %1215 = vmatprep.subr.mxu0 0.0
        %1216 = vmatpush1.msra.mxu0 %v1189
        %1217 = vmatprep.subr.mxu0 0.0
        %1218 = vmatpush1.msra.mxu0 0.0
        %1219 = vmatprep.subr.mxu0 0.0
        %1220 = vmatpush1.msra.mxu0 0.0
        %1221 = vmatprep.subr.mxu0 0.0
        %1222 = vmatpush1.msra.mxu0 0.0
        %1223 = vmatprep.subr.mxu0 0.0
        %1224 = vmatpush1.msra.mxu0 0.0
        %1225 = vmatprep.subr.mxu0 0.0
        %1226 = vmatpush1.msra.mxu0 0.0
        %1227 = vmatprep.subr.mxu0 0.0
        %1228 = vmatpush1.msra.mxu0 0.0
        %1229 = vmatprep.subr.mxu0 0.0
        %1230 = vmatpush1.msra.mxu0 0.0
        %1231 = vmatprep.subr.mxu0 0.0
        %1232 = vmatpush1.msra.mxu0 0.0
        %1233 = vmatprep.subr.mxu0 0.0
        %1234 = vmatpush1.msra.mxu0 0.0
        %1235 = vmatprep.subr.mxu0 0.0
        %1236 = vmatpush1.msra.mxu0 0.0
        %1237 = vmatprep.subr.mxu0 0.0
        %1238 = vmatpush1.msra.mxu0 0.0
        %1239 = vmatprep.subr.mxu0 0.0
        %1240 = vmatpush1.msra.mxu0 0.0
        %1241 = vmatprep.subr.mxu0 0.0
        %1242 = vmatpush1.msra.mxu0 0.0
        %1243 = vmatprep.subr.mxu0 0.0
        %1244 = vmatpush1.msra.mxu0 0.0
        %1245 = vmatprep.subr.mxu0 0.0
        %1246 = vmatpush1.msra.mxu0 0.0
        %1247 = vmatprep.subr.mxu0 0.0
        %1248 = vmatpush1.msra.mxu0 0.0
        %1249 = vmatprep.subr.mxu0 0.0
        %1250 = vmatpush1.msra.mxu0 0.0
        %1251 = vmatprep.subr.mxu0 0.0
        %1252 = vmatpush1.msra.mxu0 0.0
        %1253 = vmatprep.subr.mxu0 0.0
        %1254 = vmatpush1.msra.mxu0 0.0
        %1255 = vmatprep.subr.mxu0 0.0
        %1256 = vmatpush1.msra.mxu0 0.0
        %1257 = vmatprep.subr.mxu0 0.0
        %1258 = vmatpush1.msra.mxu0 0.0
        %1259 = vmatprep.subr.mxu0 0.0
        %1260 = vmatpush1.msra.mxu0 0.0
        %1261 = vmatprep.subr.mxu0 0.0
        %1262 = vmatpush1.msra.mxu0 0.0
        %1263 = vmatprep.subr.mxu0 0.0
        %1264 = vmatpush1.msra.mxu0 0.0
        %1265 = vmatprep.mubr.f32.mxu0 0.0
        %1266 = vmatmul.mubr.f32.gmra.mrb[0].mxu0 %v1199
        %v1267 = vpop.f32.mrb[0].mxu0
        %v1268 = vadd.f32 %v1195, %v1267
        %v1269 = vpop.f32.mrb[0].mxu0
        %1270 = vdwg.mxu0
        %v1271 = vadd.f32 %v666, %v1268
        %v1272 = vmul.f32 %v1271, %v1271
        %v1273 = vsel %vm649, %v1272, 0.0
        %1274 = vadd.xlane.f32.xlu0 %v1273
        %v1275 = vpop.xlane.xlu0 %1274
        %v1276 = vrot.slane %v1275, 4
        %v1277 = vadd.f32 %v1275, %v1276
        %v1278 = vrot.slane %v1277, 2
        %v1279 = vadd.f32 %v1277, %v1278
        %v1280 = vrot.slane %v1279, 1
        %v1281 = vadd.f32 %v1279, %v1280
        %s1282 = vtos %v1281
        %s1283 = smul.f32 %s1282, 0.00390625
        %v1284 = vmul.f32 %v647, %v1271
        %v1285 = vstv %s1283
        %v1286 = vrsqrt.pop %v1285
        %s1287 = vtos %v1286
        %v1288 = vstv %s1287
        %v1289 = vmul.f32 %v1284, %v1288
        %v1290 = vld [vmem:[%s8] sm:$0xff]
        %v1291 = vld [vmem:[%s8 + $0x8] sm:$0xff]
        %v1292 = vld [vmem:[%s8 + $0x10] sm:$0xff]
        %v1293 = vld [vmem:[%s8 + $0x18] sm:$0xff]
        %v1294 = vld [vmem:[%s9] sm:$0x1]
        %v1296 = vlaneseq
        %v1297 = vshrl.u32 %v1296, 7
        %v1298 = vsub.s32 0, %v1297
        %v1299 = vrot.slane %v1294, %v1298
        %v1302 = vsel %vm649, %v1289, 0
        %1304 = vmatprep.subr.mxu0 0.0
        %1305 = vmatpush1.msra.mxu0 %v1290
        %1306 = vmatprep.subr.mxu0 0.0
        %1307 = vmatpush1.msra.mxu0 %v1291
        %1308 = vmatprep.subr.mxu0 0.0
        %1309 = vmatpush1.msra.mxu0 %v1292
        %1310 = vmatprep.subr.mxu0 0.0
        %1311 = vmatpush1.msra.mxu0 %v1293
        %1312 = vmatprep.subr.mxu0 0.0
        %1313 = vmatpush1.msra.mxu0 0.0
        %1314 = vmatprep.subr.mxu0 0.0
        %1315 = vmatpush1.msra.mxu0 0.0
        %1316 = vmatprep.subr.mxu0 0.0
        %1317 = vmatpush1.msra.mxu0 0.0
        %1318 = vmatprep.subr.mxu0 0.0
        %1319 = vmatpush1.msra.mxu0 0.0
        %1320 = vmatprep.subr.mxu0 0.0
        %1321 = vmatpush1.msra.mxu0 0.0
        %1322 = vmatprep.subr.mxu0 0.0
        %1323 = vmatpush1.msra.mxu0 0.0
        %1324 = vmatprep.subr.mxu0 0.0
        %1325 = vmatpush1.msra.mxu0 0.0
        %1326 = vmatprep.subr.mxu0 0.0
        %1327 = vmatpush1.msra.mxu0 0.0
        %1328 = vmatprep.subr.mxu0 0.0
        %1329 = vmatpush1.msra.mxu0 0.0
        %1330 = vmatprep.subr.mxu0 0.0
        %1331 = vmatpush1.msra.mxu0 0.0
        %1332 = vmatprep.subr.mxu0 0.0
        %1333 = vmatpush1.msra.mxu0 0.0
        %1334 = vmatprep.subr.mxu0 0.0
        %1335 = vmatpush1.msra.mxu0 0.0
        %1336 = vmatprep.subr.mxu0 0.0
        %1337 = vmatpush1.msra.mxu0 0.0
        %1338 = vmatprep.subr.mxu0 0.0
        %1339 = vmatpush1.msra.mxu0 0.0
        %1340 = vmatprep.subr.mxu0 0.0
        %1341 = vmatpush1.msra.mxu0 0.0
        %1342 = vmatprep.subr.mxu0 0.0
        %1343 = vmatpush1.msra.mxu0 0.0
        %1344 = vmatprep.subr.mxu0 0.0
        %1345 = vmatpush1.msra.mxu0 0.0
        %1346 = vmatprep.subr.mxu0 0.0
        %1347 = vmatpush1.msra.mxu0 0.0
        %1348 = vmatprep.subr.mxu0 0.0
        %1349 = vmatpush1.msra.mxu0 0.0
        %1350 = vmatprep.subr.mxu0 0.0
        %1351 = vmatpush1.msra.mxu0 0.0
        %1352 = vmatprep.subr.mxu0 0.0
        %1353 = vmatpush1.msra.mxu0 0.0
        %1354 = vmatprep.subr.mxu0 0.0
        %1355 = vmatpush1.msra.mxu0 0.0
        %1356 = vmatprep.subr.mxu0 0.0
        %1357 = vmatpush1.msra.mxu0 0.0
        %1358 = vmatprep.subr.mxu0 0.0
        %1359 = vmatpush1.msra.mxu0 0.0
        %1360 = vmatprep.subr.mxu0 0.0
        %1361 = vmatpush1.msra.mxu0 0.0
        %1362 = vmatprep.subr.mxu0 0.0
        %1363 = vmatpush1.msra.mxu0 0.0
        %1364 = vmatprep.subr.mxu0 0.0
        %1365 = vmatpush1.msra.mxu0 0.0
        %1366 = vmatprep.subr.mxu0 0.0
        %1367 = vmatpush1.msra.mxu0 0.0
        %1368 = vmatprep.mubr.f32.mxu0 0.0
        %1369 = vmatmul.mubr.f32.gmra.mrb[0].mxu0 %v1302
        %v1370 = vpop.f32.mrb[0].mxu0
        %v1371 = vadd.f32 %v1299, %v1370
        %v1372 = vpop.f32.mrb[0].mxu0
        %1373 = vdwg.mxu0
        %v1374 = vld [vmem:[%s10] sm:$0xff]
        %v1375 = vld [vmem:[%s10 + $0x8] sm:$0xff]
        %v1376 = vld [vmem:[%s10 + $0x10] sm:$0xff]
        %v1377 = vld [vmem:[%s10 + $0x18] sm:$0xff]
        %v1378 = vld [vmem:[%s11] sm:$0x1]
        %v1380 = vlaneseq
        %v1381 = vshrl.u32 %v1380, 7
        %v1382 = vsub.s32 0, %v1381
        %v1383 = vrot.slane %v1378, %v1382
        %v1386 = vsel %vm649, %v1371, 0
        %1388 = vmatprep.subr.mxu0 0.0
        %1389 = vmatpush1.msra.mxu0 %v1374
        %1390 = vmatprep.subr.mxu0 0.0
        %1391 = vmatpush1.msra.mxu0 %v1375
        %1392 = vmatprep.subr.mxu0 0.0
        %1393 = vmatpush1.msra.mxu0 %v1376
        %1394 = vmatprep.subr.mxu0 0.0
        %1395 = vmatpush1.msra.mxu0 %v1377
        %1396 = vmatprep.subr.mxu0 0.0
        %1397 = vmatpush1.msra.mxu0 0.0
        %1398 = vmatprep.subr.mxu0 0.0
        %1399 = vmatpush1.msra.mxu0 0.0
        %1400 = vmatprep.subr.mxu0 0.0
        %1401 = vmatpush1.msra.mxu0 0.0
        %1402 = vmatprep.subr.mxu0 0.0
        %1403 = vmatpush1.msra.mxu0 0.0
        %1404 = vmatprep.subr.mxu0 0.0
        %1405 = vmatpush1.msra.mxu0 0.0
        %1406 = vmatprep.subr.mxu0 0.0
        %1407 = vmatpush1.msra.mxu0 0.0
        %1408 = vmatprep.subr.mxu0 0.0
        %1409 = vmatpush1.msra.mxu0 0.0
        %1410 = vmatprep.subr.mxu0 0.0
        %1411 = vmatpush1.msra.mxu0 0.0
        %1412 = vmatprep.subr.mxu0 0.0
        %1413 = vmatpush1.msra.mxu0 0.0
        %1414 = vmatprep.subr.mxu0 0.0
        %1415 = vmatpush1.msra.mxu0 0.0
        %1416 = vmatprep.subr.mxu0 0.0
        %1417 = vmatpush1.msra.mxu0 0.0
        %1418 = vmatprep.subr.mxu0 0.0
        %1419 = vmatpush1.msra.mxu0 0.0
        %1420 = vmatprep.subr.mxu0 0.0
        %1421 = vmatpush1.msra.mxu0 0.0
        %1422 = vmatprep.subr.mxu0 0.0
        %1423 = vmatpush1.msra.mxu0 0.0
        %1424 = vmatprep.subr.mxu0 0.0
        %1425 = vmatpush1.msra.mxu0 0.0
        %1426 = vmatprep.subr.mxu0 0.0
        %1427 = vmatpush1.msra.mxu0 0.0
        %1428 = vmatprep.subr.mxu0 0.0
        %1429 = vmatpush1.msra.mxu0 0.0
        %1430 = vmatprep.subr.mxu0 0.0
        %1431 = vmatpush1.msra.mxu0 0.0
        %1432 = vmatprep.subr.mxu0 0.0
        %1433 = vmatpush1.msra.mxu0 0.0
        %1434 = vmatprep.subr.mxu0 0.0
        %1435 = vmatpush1.msra.mxu0 0.0
        %1436 = vmatprep.subr.mxu0 0.0
        %1437 = vmatpush1.msra.mxu0 0.0
        %1438 = vmatprep.subr.mxu0 0.0
        %1439 = vmatpush1.msra.mxu0 0.0
        %1440 = vmatprep.subr.mxu0 0.0
        %1441 = vmatpush1.msra.mxu0 0.0
        %1442 = vmatprep.subr.mxu0 0.0
        %1443 = vmatpush1.msra.mxu0 0.0
        %1444 = vmatprep.subr.mxu0 0.0
        %1445 = vmatpush1.msra.mxu0 0.0
        %1446 = vmatprep.subr.mxu0 0.0
        %1447 = vmatpush1.msra.mxu0 0.0
        %1448 = vmatprep.subr.mxu0 0.0
        %1449 = vmatpush1.msra.mxu0 0.0
        %1450 = vmatprep.subr.mxu0 0.0
        %1451 = vmatpush1.msra.mxu0 0.0
        %1452 = vmatprep.mubr.f32.mxu0 0.0
        %1453 = vmatmul.mubr.f32.gmra.mrb[0].mxu0 %v1386
        %v1454 = vpop.f32.mrb[0].mxu0
        %v1455 = vadd.f32 %v1383, %v1454
        %v1456 = vpop.f32.mrb[0].mxu0
        %1457 = vdwg.mxu0
        %v1458 = vld [vmem:[#allocation12] sm:$0xff]
        %v1459 = vld [vmem:[#allocation12 + $0x8] sm:$0xff]
        %v1460 = vld [vmem:[#allocation12 + $0x10] sm:$0xff]
        %v1461 = vld [vmem:[#allocation12 + $0x18] sm:$0xff]
        %v1462 = vld [vmem:[%s13] sm:$0x1]
        %v1464 = vlaneseq
        %v1465 = vshrl.u32 %v1464, 7
        %v1466 = vsub.s32 0, %v1465
        %v1467 = vrot.slane %v1462, %v1466
        %1469 = vmatprep.subr.mxu0 0.0
        %1470 = vmatpush1.msra.mxu0 %v1458
        %1471 = vmatprep.subr.mxu0 0.0
        %1472 = vmatpush1.msra.mxu0 %v1459
        %1473 = vmatprep.subr.mxu0 0.0
        %1474 = vmatpush1.msra.mxu0 %v1460
        %1475 = vmatprep.subr.mxu0 0.0
        %1476 = vmatpush1.msra.mxu0 %v1461
        %1477 = vmatprep.subr.mxu0 0.0
        %1478 = vmatpush1.msra.mxu0 0.0
        %1479 = vmatprep.subr.mxu0 0.0
        %1480 = vmatpush1.msra.mxu0 0.0
        %1481 = vmatprep.subr.mxu0 0.0
        %1482 = vmatpush1.msra.mxu0 0.0
        %1483 = vmatprep.subr.mxu0 0.0
        %1484 = vmatpush1.msra.mxu0 0.0
        %1485 = vmatprep.subr.mxu0 0.0
        %1486 = vmatpush1.msra.mxu0 0.0
        %1487 = vmatprep.subr.mxu0 0.0
        %1488 = vmatpush1.msra.mxu0 0.0
        %1489 = vmatprep.subr.mxu0 0.0
        %1490 = vmatpush1.msra.mxu0 0.0
        %1491 = vmatprep.subr.mxu0 0.0
        %1492 = vmatpush1.msra.mxu0 0.0
        %1493 = vmatprep.subr.mxu0 0.0
        %1494 = vmatpush1.msra.mxu0 0.0
        %1495 = vmatprep.subr.mxu0 0.0
        %1496 = vmatpush1.msra.mxu0 0.0
        %1497 = vmatprep.subr.mxu0 0.0
        %1498 = vmatpush1.msra.mxu0 0.0
        %1499 = vmatprep.subr.mxu0 0.0
        %1500 = vmatpush1.msra.mxu0 0.0
        %1501 = vmatprep.subr.mxu0 0.0
        %1502 = vmatpush1.msra.mxu0 0.0
        %1503 = vmatprep.subr.mxu0 0.0
        %1504 = vmatpush1.msra.mxu0 0.0
        %1505 = vmatprep.subr.mxu0 0.0
        %1506 = vmatpush1.msra.mxu0 0.0
        %1507 = vmatprep.subr.mxu0 0.0
        %1508 = vmatpush1.msra.mxu0 0.0
        %1509 = vmatprep.subr.mxu0 0.0
        %1510 = vmatpush1.msra.mxu0 0.0
        %1511 = vmatprep.subr.mxu0 0.0
        %1512 = vmatpush1.msra.mxu0 0.0
        %1513 = vmatprep.subr.mxu0 0.0
        %1514 = vmatpush1.msra.mxu0 0.0
        %1515 = vmatprep.subr.mxu0 0.0
        %1516 = vmatpush1.msra.mxu0 0.0
        %1517 = vmatprep.subr.mxu0 0.0
        %1518 = vmatpush1.msra.mxu0 0.0
        %1519 = vmatprep.subr.mxu0 0.0
        %1520 = vmatpush1.msra.mxu0 0.0
        %1521 = vmatprep.subr.mxu0 0.0
        %1522 = vmatpush1.msra.mxu0 0.0
        %1523 = vmatprep.subr.mxu0 0.0
        %1524 = vmatpush1.msra.mxu0 0.0
        %1525 = vmatprep.subr.mxu0 0.0
        %1526 = vmatpush1.msra.mxu0 0.0
        %1527 = vmatprep.subr.mxu0 0.0
        %1528 = vmatpush1.msra.mxu0 0.0
        %1529 = vmatprep.subr.mxu0 0.0
        %1530 = vmatpush1.msra.mxu0 0.0
        %1531 = vmatprep.subr.mxu0 0.0
        %1532 = vmatpush1.msra.mxu0 0.0
        %1533 = vmatprep.mubr.f32.mxu0 0.0
        %1534 = vmatmul.mubr.f32.gmra.mrb[0].mxu0 %v1386
        %v1535 = vpop.f32.mrb[0].mxu0
        %v1536 = vadd.f32 %v1467, %v1535
        %v1537 = vpop.f32.mrb[0].mxu0
        %1538 = vdwg.mxu0
        %s1539 = sld [smem:[#allocation2]]
        %v1540 = vstv %s1539
        %v1541 = vmul.f32 %v1540, %v1455
        %v1542 = vsub.f32 0.0, %v1541
        %v1543 = vmul.f32 %v1542, 1.442695
        %v1544 = vpow.pop %v1543
        %v1545 = vadd.f32 %v1544, 1.0
        %v1546 = vrcp.pop %v1545
        %v1547 = vmul.f32 1.0, %v1546
        %v1548 = vmul.f32 %v1455, %v1547
        %v1549 = vmul.f32 %v1548, %v1536
        %v1550 = vadd.f32 %v1289, %v1549
        %v1551 = vld [vmem:[#allocation14] sm:$0xff]
        %v1552 = vld [vmem:[#allocation14 + $0x8] sm:$0xff]
        %v1553 = vld [vmem:[#allocation14 + $0x10] sm:$0xff]
        %v1554 = vld [vmem:[#allocation14 + $0x18] sm:$0xff]
        %v1555 = vld [vmem:[%s16] sm:$0x1]
        %v1557 = vlaneseq
        %v1558 = vshrl.u32 %v1557, 7
        %v1559 = vsub.s32 0, %v1558
        %v1560 = vrot.slane %v1555, %v1559
        %v1563 = vsel %vm649, %v1550, 0
        %1565 = vmatprep.subr.mxu0 0.0
        %1566 = vmatpush1.msra.mxu0 %v1551
        %1567 = vmatprep.subr.mxu0 0.0
        %1568 = vmatpush1.msra.mxu0 %v1552
        %1569 = vmatprep.subr.mxu0 0.0
        %1570 = vmatpush1.msra.mxu0 %v1553
        %1571 = vmatprep.subr.mxu0 0.0
        %1572 = vmatpush1.msra.mxu0 %v1554
        %1573 = vmatprep.subr.mxu0 0.0
        %1574 = vmatpush1.msra.mxu0 0.0
        %1575 = vmatprep.subr.mxu0 0.0
        %1576 = vmatpush1.msra.mxu0 0.0
        %1577 = vmatprep.subr.mxu0 0.0
        %1578 = vmatpush1.msra.mxu0 0.0
        %1579 = vmatprep.subr.mxu0 0.0
        %1580 = vmatpush1.msra.mxu0 0.0
        %1581 = vmatprep.subr.mxu0 0.0
        %1582 = vmatpush1.msra.mxu0 0.0
        %1583 = vmatprep.subr.mxu0 0.0
        %1584 = vmatpush1.msra.mxu0 0.0
        %1585 = vmatprep.subr.mxu0 0.0
        %1586 = vmatpush1.msra.mxu0 0.0
        %1587 = vmatprep.subr.mxu0 0.0
        %1588 = vmatpush1.msra.mxu0 0.0
        %1589 = vmatprep.subr.mxu0 0.0
        %1590 = vmatpush1.msra.mxu0 0.0
        %1591 = vmatprep.subr.mxu0 0.0
        %1592 = vmatpush1.msra.mxu0 0.0
        %1593 = vmatprep.subr.mxu0 0.0
        %1594 = vmatpush1.msra.mxu0 0.0
        %1595 = vmatprep.subr.mxu0 0.0
        %1596 = vmatpush1.msra.mxu0 0.0
        %1597 = vmatprep.subr.mxu0 0.0
        %1598 = vmatpush1.msra.mxu0 0.0
        %1599 = vmatprep.subr.mxu0 0.0
        %1600 = vmatpush1.msra.mxu0 0.0
        %1601 = vmatprep.subr.mxu0 0.0
        %1602 = vmatpush1.msra.mxu0 0.0
        %1603 = vmatprep.subr.mxu0 0.0
        %1604 = vmatpush1.msra.mxu0 0.0
        %1605 = vmatprep.subr.mxu0 0.0
        %1606 = vmatpush1.msra.mxu0 0.0
        %1607 = vmatprep.subr.mxu0 0.0
        %1608 = vmatpush1.msra.mxu0 0.0
        %1609 = vmatprep.subr.mxu0 0.0
        %1610 = vmatpush1.msra.mxu0 0.0
        %1611 = vmatprep.subr.mxu0 0.0
        %1612 = vmatpush1.msra.mxu0 0.0
        %1613 = vmatprep.subr.mxu0 0.0
        %1614 = vmatpush1.msra.mxu0 0.0
        %1615 = vmatprep.subr.mxu0 0.0
        %1616 = vmatpush1.msra.mxu0 0.0
        %1617 = vmatprep.subr.mxu0 0.0
        %1618 = vmatpush1.msra.mxu0 0.0
        %1619 = vmatprep.subr.mxu0 0.0
        %1620 = vmatpush1.msra.mxu0 0.0
        %1621 = vmatprep.subr.mxu0 0.0
        %1622 = vmatpush1.msra.mxu0 0.0
        %1623 = vmatprep.subr.mxu0 0.0
        %1624 = vmatpush1.msra.mxu0 0.0
        %1625 = vmatprep.subr.mxu0 0.0
        %1626 = vmatpush1.msra.mxu0 0.0
        %1627 = vmatprep.subr.mxu0 0.0
        %1628 = vmatpush1.msra.mxu0 0.0
        %1629 = vmatprep.mubr.f32.mxu0 0.0
        %1630 = vmatmul.mubr.f32.gmra.mrb[0].mxu0 %v1563
        %v1631 = vpop.f32.mrb[0].mxu0
        %v1632 = vadd.f32 %v1560, %v1631
        %v1633 = vpop.f32.mrb[0].mxu0
        %1634 = vdwg.mxu0
        %1635 = vst.msk [vmem:[%s645] sm:$0xff] %vm1197, %v1632
        %s1636 = sand.u32 %s408, 1
        %s1637 = scalar_lea.sflag [#allocation5], %s1636
        %s1638 = sand.u32 %s408, 1
        %s1639 = smul.addr %s1638, 8
        %s1640 = scalar_lea.vmem [#allocation15], %s1639
        // Predicated region
        $region117: #{tpu_custom_call.1} parent=87 // pred_check
          %p1641 = pneg %p418
        $region118: #{tpu_custom_call.1} parent=87 // pred_check_branch
          %1643 = sbr.rel (%p1641) target = $region120
        $region119: #{tpu_custom_call.1} parent=87 // pred_region
          %s1645 = ssub.s32 128, 128
          %1646 = vsyncadd %s1637, %s1645
          %s1647 = smul.addr %s38, 128
          %s1648 = scalar_lea.hbm %s17, %s1647
          %s1650 = sshll.u32 %s1640, 4
          %s1651 = int_to_ptr.vmem [resolvable:$true] %s1650
          %1653 = dma.vmem_to_hbm [thread:$0]  %s1651, 128, %s1648, %s1637
        $region120: #{tpu_custom_call.1} parent=87 // pred_fallthru
          _
      $region88: #{tpu_custom_call.1} parent=5 // pred_fallthru
        _
      %p1654 = scmp.le.s32.totalorder 2, %s33
      // Predicated region
      $region121: #{tpu_custom_call.1} parent=5 // pred_check
        %p1655 = pneg %p1654
      $region122: #{tpu_custom_call.1} parent=5 // pred_check_branch
        %1657 = sbr.rel (%p1655) target = $region124
      $region123: #{tpu_custom_call.1} parent=5 // pred_region
        %s1658 = ssub.s32 %s33, 2
        // Predicated region
        $region125: #{tpu_custom_call.1} parent=123 // pred_check
          %p1659 = pneg %p424
        $region126: #{tpu_custom_call.1} parent=123 // pred_check_branch
          %1661 = sbr.rel (%p1659) target = $region128
        $region127: #{tpu_custom_call.1} parent=123 // pred_region
          %s1662 = sand.u32 %s409, 1
          %s1663 = scalar_lea.sflag [#allocation5], %s1662
          %s1664 = sand.u32 %s409, 1
          %s1665 = smul.addr %s1664, 8
          %s1666 = scalar_lea.vmem [#allocation15], %s1665
          %1667 = dma.done %s1663, 128
        $region128: #{tpu_custom_call.1} parent=123 // pred_fallthru
          _
      $region124: #{tpu_custom_call.1} parent=5 // pred_fallthru
        _
    $region6: #{tpu_custom_call.1} parent=1 // loop_footer
      %s37 = sadd.s32 1, %s33
    $region7: #{tpu_custom_call.1} parent=1 // loop_footer_branch
      %32 = sbr.rel target = $region3
    $region8: #{tpu_custom_call.1} parent=1 // loop_exit
      _
    %1668 = vsyncpa [#allocation4], 1
    %s1669 = scalar_lea.sflag [#allocation4], 1
    %1670 = vsyncpa %s1669, 1
    %1671 = vsyncpa [#allocation7], 1
    %1672 = vsyncpa [#allocation10], 1
    %1673 = vsyncpa [#allocation13], 1
    %1674 = vsyncpa [#allocation5], 1
    %s1675 = scalar_lea.sflag [#allocation5], 1
    %1676 = vsyncpa %s1675, 1

</llo_original>
